<compile_context>
chip_gen: v7x
topology: tpu7x:2x2x1
jax: 0.10.0
libtpu: 0.0.40
codegen_flags: <defaults>
</compile_context>

<pallas_src>
import math
from functools import partial

import jax
import jax.numpy as jnp
from jax.experimental import pallas as pl
from jax.experimental.pallas import tpu as pltpu


# ------------------------------- helpers -------------------------------

def _gelu(y):
    # exact (erf) GELU, matching PyTorch nn.GELU default
    return 0.5 * y * (1.0 + jax.lax.erf(y * (1.0 / math.sqrt(2.0))))


def _layernorm(v, gamma, beta, eps):
    mu = jnp.mean(v, axis=-1, keepdims=True)
    vc = v - mu
    var = jnp.mean(vc * vc, axis=-1, keepdims=True)
    return vc * jax.lax.rsqrt(var + eps) * gamma + beta


def _vmem_limit_bytes():
    """Generation-aware scoped-VMEM limit with headroom (falls back safely off-TPU)."""
    try:
        cap = int(pltpu.get_tpu_info().vmem_capacity_bytes)
    except Exception:
        cap = 64 * 1024 * 1024
    return max(16 * 1024 * 1024, min((cap * 5) // 8, 96 * 1024 * 1024))


def _full_spec(shape):
    nd = len(shape)
    return pl.BlockSpec(shape, lambda i, _nd=nd: (0,) * _nd)


# --------------------------- fused block kernel ---------------------------

def _fused_block_kernel(x_ref, ln1g_ref, ln1b_ref, wqkv_ref, bqkv_ref,
                        wout_ref, bout_ref, ln2g_ref, ln2b_ref,
                        wfc1_ref, bfc1_ref, wfc2_ref, bfc2_ref,
                        o_ref, *, num_heads, batch, eps):
    N, E = x_ref.shape
    hd = E // num_heads
    scale = 1.0 / math.sqrt(hd)

    x = x_ref[...].astype(jnp.float32)                                   # (N, E)

    # --- LayerNorm 1 + packed QKV projection (VMEM resident) ---
    x1 = _layernorm(x, ln1g_ref[...].astype(jnp.float32),
                    ln1b_ref[...].astype(jnp.float32), eps)
    qkv = jnp.dot(x1, wqkv_ref[...].astype(jnp.float32),
                  preferred_element_type=jnp.float32) \
          + bqkv_ref[...].astype(jnp.float32)                            # (N, 3E)

    # --- multi-head self-attention, all batches at once via same-batch masking ---
    # tokens are row-major flattened (S, B, E) -> row i belongs to batch i % B
    ri = jax.lax.broadcasted_iota(jnp.int32, (N, N), 0)
    ci = jax.lax.broadcasted_iota(jnp.int32, (N, N), 1)
    same_batch = (ri % batch) == (ci % batch)
    neg = jnp.float32(-1e30)

    heads_out = []
    for h in range(num_heads):                                           # static unroll (tiny)
        lo = h * hd
        q = qkv[:, lo:lo + hd] * scale                                   # (N, hd)
        k = qkv[:, E + lo:E + lo + hd]                                   # (N, hd)
        v = qkv[:, 2 * E + lo:2 * E + lo + hd]                           # (N, hd)
        # q @ k^T without an explicit transpose (contract last dims)
        s = jax.lax.dot_general(q, k, (((1,), (1,)), ((), ())),
                                preferred_element_type=jnp.float32)      # (N, N)
        s = jnp.where(same_batch, s, neg)
        m = jnp.max(s, axis=-1, keepdims=True)
        p = jnp.exp(s - m)
        l = jnp.sum(p, axis=-1, keepdims=True)
        o = jnp.dot(p, v, preferred_element_type=jnp.float32)            # (N, hd)
        heads_out.append(o / l)                                          # exact normalization
    attn = jnp.concatenate(heads_out, axis=-1)                           # (N, E)

    # --- out_proj + residual ---
    x2 = jnp.dot(attn, wout_ref[...].astype(jnp.float32),
                 preferred_element_type=jnp.float32) \
         + bout_ref[...].astype(jnp.float32) + x                         # (N, E)

    # --- LayerNorm 2 + MLP (fc1 -> GELU -> fc2 -> GELU) + residual ---
    x3 = _layernorm(x2, ln2g_ref[...].astype(jnp.float32),
                    ln2b_ref[...].astype(jnp.float32), eps)
    h1 = _gelu(jnp.dot(x3, wfc1_ref[...].astype(jnp.float32),
                       preferred_element_type=jnp.float32)
               + bfc1_ref[...].astype(jnp.float32))                      # (N, H)
    h2 = _gelu(jnp.dot(h1, wfc2_ref[...].astype(jnp.float32),
                       preferred_element_type=jnp.float32)
               + bfc2_ref[...].astype(jnp.float32))                      # (N, E)

    o_ref[...] = (x2 + h2).astype(o_ref.dtype)


def transformer_block(x, params, num_heads):
    """x: (S, B, E) seq-first, matching PyTorch nn.MultiheadAttention."""
    S, B, E = x.shape
    assert E % num_heads == 0
    N = S * B
    H = params["w_fc1"].shape[1]
    hd = E // num_heads

    # Free row-major flatten (no transpose, no copy): token i = (seq i // B, batch i % B)
    x2d = x.reshape(N, E)

    args = (
        x2d,
        params["ln1_g"].reshape(1, E), params["ln1_b"].reshape(1, E),
        params["w_qkv"], params["b_qkv"].reshape(1, 3 * E),
        params["w_out"], params["b_out"].reshape(1, E),
        params["ln2_g"].reshape(1, E), params["ln2_b"].reshape(1, E),
        params["w_fc1"], params["b_fc1"].reshape(1, H),
        params["w_fc2"], params["b_fc2"].reshape(1, E),
    )

    flops = (2 * N * E * 3 * E            # qkv proj
             + num_heads * 4 * N * N * hd  # scores + p@v
             + 2 * N * E * E               # out proj
             + 2 * N * E * H + 2 * N * H * E)  # fc1 + fc2
    transcend = num_heads * N * N + N * H + N * E
    bytes_acc = 4 * sum(int(a.size) for a in args) + 4 * N * E

    out = pl.pallas_call(
        partial(_fused_block_kernel, num_heads=num_heads, batch=B, eps=1e-6),
        out_shape=jax.ShapeDtypeStruct((N, E), x.dtype),
        grid=(1,),
        in_specs=[_full_spec(a.shape) for a in args],
        out_specs=_full_spec((N, E)),
        compiler_params=pltpu.CompilerParams(
            dimension_semantics=("arbitrary",),
            vmem_limit_bytes=_vmem_limit_bytes()),
        cost_estimate=pl.CostEstimate(flops=flops, transcendentals=transcend,
                                      bytes_accessed=bytes_acc),
    )(*args)

    return out.reshape(S, B, E)   # free reshape back to seq-first


# ------------------------------ pure-JAX reference ------------------------------

def transformer_block_ref(x, params, num_heads):
    S, B, E = x.shape
    hd = E // num_heads

    def ln(v, g, b):
        mu = v.mean(-1, keepdims=True)
        vc = v - mu
        var = (vc * vc).mean(-1, keepdims=True)
        return vc * jax.lax.rsqrt(var + 1e-6) * g + b

    x1 = ln(x, params["ln1_g"], params["ln1_b"])
    qkv = x1 @ params["w_qkv"] + params["b_qkv"]                  # (S, B, 3E)
    q, k, v = jnp.split(qkv, 3, axis=-1)
    q = q.reshape(S, B, num_heads, hd).transpose(1, 2, 0, 3) * (1.0 / math.sqrt(hd))
    k = k.reshape(S, B, num_heads, hd).transpose(1, 2, 0, 3)
    v = v.reshape(S, B, num_heads, hd).transpose(1, 2, 0, 3)      # (B, Hh, S, hd)
    s = jnp.einsum('bhqd,bhkd->bhqk', q, k)
    p = jax.nn.softmax(s, axis=-1)
    o = jnp.einsum('bhqk,bhkd->bhqd', p, v)
    attn = o.transpose(2, 0, 1, 3).reshape(S, B, E)
    x2 = attn @ params["w_out"] + params["b_out"] + x
    x3 = ln(x2, params["ln2_g"], params["ln2_b"])
    h = _gelu(x3 @ params["w_fc1"] + params["b_fc1"])
    y = _gelu(h @ params["w_fc2"] + params["b_fc2"])
    return x2 + y


# ---------------------------------- main ----------------------------------

def init_params(key, embed_dim, num_heads, mlp_ratio):
    E = embed_dim
    H = E * mlp_ratio
    ks = jax.random.split(key, 8)
    std = 0.02
    # Weights stored pre-transposed (in_features, out_features): no per-call weight transpose.
    return {
        "ln1_g": jnp.ones((E,), jnp.float32),
        "ln1_b": jnp.zeros((E,), jnp.float32),
        "w_qkv": std * jax.random.normal(ks[0], (E, 3 * E), jnp.float32),
        "b_qkv": std * jax.random.normal(ks[1], (3 * E,), jnp.float32),
        "w_out": std * jax.random.normal(ks[2], (E, E), jnp.float32),
        "b_out": std * jax.random.normal(ks[3], (E,), jnp.float32),
        "ln2_g": jnp.ones((E,), jnp.float32),
        "ln2_b": jnp.zeros((E,), jnp.float32),
        "w_fc1": std * jax.random.normal(ks[4], (E, H), jnp.float32),
        "b_fc1": std * jax.random.normal(ks[5], (H,), jnp.float32),
        "w_fc2": std * jax.random.normal(ks[6], (H, E), jnp.float32),
        "b_fc2": std * jax.random.normal(ks[7], (E,), jnp.float32),
    }


if __name__ == "__main__":
    S, B, E = 8, 2, 32          # seq, batch, embed_dim (small, consistent with the module)
    num_heads, mlp_ratio = 4, 4

    key = jax.random.PRNGKey(0)
    kx, kp = jax.random.split(key)
    x = jax.random.normal(kx, (S, B, E), jnp.float32)   # seq-first (S, B, E), PyTorch convention
    params = init_params(kp, E, num_heads, mlp_ratio)

    fwd = jax.jit(partial(transformer_block, num_heads=num_heads))
    out = fwd(x, params)
    jax.block_until_ready(out)

    assert out.shape == (S, B, E) and out.dtype == jnp.float32
    assert bool(jnp.all(jnp.isfinite(out)))

    # numerical parity vs. pure-JAX reference of the same math
    ref = transformer_block_ref(x, params, num_heads)
    err = float(jnp.max(jnp.abs(out - ref)))
    assert err < 5e-3, f"max abs error vs reference: {err}"

    print("KERNEL_OK")
</pallas_src>

<mosaic_0001>
module attributes {stable_mosaic.version = 11 : i64} {
  func.func @_fused_block_kernel(%arg0: i32, %arg1: memref<16x32xf32, #tpu.memory_space<vmem>>, %arg2: memref<1x32xf32, #tpu.memory_space<vmem>>, %arg3: memref<1x32xf32, #tpu.memory_space<vmem>>, %arg4: memref<32x96xf32, #tpu.memory_space<vmem>>, %arg5: memref<1x96xf32, #tpu.memory_space<vmem>>, %arg6: memref<32x32xf32, #tpu.memory_space<vmem>>, %arg7: memref<1x32xf32, #tpu.memory_space<vmem>>, %arg8: memref<1x32xf32, #tpu.memory_space<vmem>>, %arg9: memref<1x32xf32, #tpu.memory_space<vmem>>, %arg10: memref<32x128xf32, #tpu.memory_space<vmem>>, %arg11: memref<1x128xf32, #tpu.memory_space<vmem>>, %arg12: memref<128x32xf32, #tpu.memory_space<vmem>>, %arg13: memref<1x32xf32, #tpu.memory_space<vmem>>, %arg14: memref<16x32xf32, #tpu.memory_space<vmem>>) attributes {dimension_semantics = [#tpu.dimension_semantics<arbitrary>], iteration_bounds = array<i64: 1>, scalar_prefetch = 0 : i64, scratch_operands = 0 : i64, tpu.core_type = #tpu.core_type<tc>, window_params = [{pipeline_mode = #tpu.pipeline_mode<synchronous>, transform_indices = @transform_0, window_bounds = array<i64: 16, 32>}, {pipeline_mode = #tpu.pipeline_mode<synchronous>, transform_indices = @transform_1, window_bounds = array<i64: 1, 32>}, {pipeline_mode = #tpu.pipeline_mode<synchronous>, transform_indices = @transform_2, window_bounds = array<i64: 1, 32>}, {pipeline_mode = #tpu.pipeline_mode<synchronous>, transform_indices = @transform_3, window_bounds = array<i64: 32, 96>}, {pipeline_mode = #tpu.pipeline_mode<synchronous>, transform_indices = @transform_4, window_bounds = array<i64: 1, 96>}, {pipeline_mode = #tpu.pipeline_mode<synchronous>, transform_indices = @transform_5, window_bounds = array<i64: 32, 32>}, {pipeline_mode = #tpu.pipeline_mode<synchronous>, transform_indices = @transform_6, window_bounds = array<i64: 1, 32>}, {pipeline_mode = #tpu.pipeline_mode<synchronous>, transform_indices = @transform_7, window_bounds = array<i64: 1, 32>}, {pipeline_mode = #tpu.pipeline_mode<synchronous>, transform_indices = @transform_8, window_bounds = array<i64: 1, 32>}, {pipeline_mode = #tpu.pipeline_mode<synchronous>, transform_indices = @transform_9, window_bounds = array<i64: 32, 128>}, {pipeline_mode = #tpu.pipeline_mode<synchronous>, transform_indices = @transform_10, window_bounds = array<i64: 1, 128>}, {pipeline_mode = #tpu.pipeline_mode<synchronous>, transform_indices = @transform_11, window_bounds = array<i64: 128, 32>}, {pipeline_mode = #tpu.pipeline_mode<synchronous>, transform_indices = @transform_12, window_bounds = array<i64: 1, 32>}, {pipeline_mode = #tpu.pipeline_mode<synchronous>, transform_indices = @transform_13, window_bounds = array<i64: 16, 32>}]} {
    %c0 = arith.constant 0 : index
    %c0_0 = arith.constant 0 : index
    %0 = vector.load %arg1[%c0, %c0_0] : memref<16x32xf32, #tpu.memory_space<vmem>>, vector<16x32xf32>
    %c0_1 = arith.constant 0 : index
    %c0_2 = arith.constant 0 : index
    %1 = vector.load %arg2[%c0_1, %c0_2] : memref<1x32xf32, #tpu.memory_space<vmem>>, vector<1x32xf32>
    %c0_3 = arith.constant 0 : index
    %c0_4 = arith.constant 0 : index
    %2 = vector.load %arg3[%c0_3, %c0_4] : memref<1x32xf32, #tpu.memory_space<vmem>>, vector<1x32xf32>
    %cst = arith.constant dense<0.000000e+00> : vector<16xf32>
    %3 = vector.multi_reduction <add>, %0, %cst [1] : vector<16x32xf32> to vector<16xf32>
    %4 = vector.shape_cast %3 : vector<16xf32> to vector<16x1xf32>
    %cst_5 = arith.constant 3.200000e+01 : f32
    %5 = vector.broadcast %cst_5 : f32 to vector<16x1xf32>
    %6 = arith.divf %4, %5 : vector<16x1xf32>
    %7 = vector.broadcast %6 : vector<16x1xf32> to vector<16x32xf32>
    %8 = arith.subf %0, %7 : vector<16x32xf32>
    %9 = arith.mulf %8, %8 : vector<16x32xf32>
    %cst_6 = arith.constant dense<0.000000e+00> : vector<16xf32>
    %10 = vector.multi_reduction <add>, %9, %cst_6 [1] : vector<16x32xf32> to vector<16xf32>
    %11 = vector.shape_cast %10 : vector<16xf32> to vector<16x1xf32>
    %cst_7 = arith.constant 3.200000e+01 : f32
    %12 = vector.broadcast %cst_7 : f32 to vector<16x1xf32>
    %13 = arith.divf %11, %12 : vector<16x1xf32>
    %cst_8 = arith.constant 9.99999997E-7 : f32
    %14 = vector.broadcast %cst_8 : f32 to vector<16x1xf32>
    %15 = arith.addf %13, %14 : vector<16x1xf32>
    %16 = math.rsqrt %15 : vector<16x1xf32>
    %17 = vector.broadcast %16 : vector<16x1xf32> to vector<16x32xf32>
    %18 = arith.mulf %8, %17 : vector<16x32xf32>
    %19 = vector.broadcast %1 : vector<1x32xf32> to vector<16x32xf32>
    %20 = arith.mulf %18, %19 : vector<16x32xf32>
    %21 = vector.broadcast %2 : vector<1x32xf32> to vector<16x32xf32>
    %22 = arith.addf %20, %21 : vector<16x32xf32>
    %c0_9 = arith.constant 0 : index
    %c0_10 = arith.constant 0 : index
    %23 = vector.load %arg4[%c0_9, %c0_10] : memref<32x96xf32, #tpu.memory_space<vmem>>, vector<32x96xf32>
    %cst_11 = arith.constant dense<0.000000e+00> : vector<16x96xf32>
    %24 = tpu.matmul %22, %23, %cst_11 {dimension_numbers = #tpu.dot_dimension_numbers<[1], [0], [0], [1], [0, 0, 1, 1], [], []>} : vector<16x32xf32>, vector<32x96xf32>, vector<16x96xf32> -> vector<16x96xf32>
    %c0_12 = arith.constant 0 : index
    %c0_13 = arith.constant 0 : index
    %25 = vector.load %arg5[%c0_12, %c0_13] : memref<1x96xf32, #tpu.memory_space<vmem>>, vector<1x96xf32>
    %26 = vector.broadcast %25 : vector<1x96xf32> to vector<16x96xf32>
    %27 = arith.addf %24, %26 : vector<16x96xf32>
    %28 = tpu.iota {dimensions = array<i32: 0>} : vector<16x16xi32>
    %29 = tpu.iota {dimensions = array<i32: 1>} : vector<16x16xi32>
    %c2_i32 = arith.constant 2 : i32
    %c0_i32 = arith.constant 0 : i32
    %30 = arith.cmpi eq, %c2_i32, %c0_i32 : i32
    %c1_i32 = arith.constant 1 : i32
    %31 = arith.select %30, %c1_i32, %c2_i32 : i32
    %32 = vector.broadcast %31 : i32 to vector<16x16xi32>
    %33 = arith.remsi %28, %32 : vector<16x16xi32>
    %c0_i32_14 = arith.constant 0 : i32
    %34 = vector.broadcast %c0_i32_14 : i32 to vector<16x16xi32>
    %35 = arith.cmpi ne, %33, %34 : vector<16x16xi32>
    %c0_i32_15 = arith.constant 0 : i32
    %36 = vector.broadcast %c0_i32_15 : i32 to vector<16x16xi32>
    %37 = arith.cmpi slt, %33, %36 : vector<16x16xi32>
    %c0_i32_16 = arith.constant 0 : i32
    %38 = arith.cmpi slt, %31, %c0_i32_16 : i32
    %39 = vector.broadcast %38 : i1 to vector<16x16xi1>
    %40 = vector.broadcast %39 : vector<16x16xi1> to vector<16x16xi1>
    %41 = arith.xori %37, %40 : vector<16x16xi1>
    %42 = arith.andi %41, %35 : vector<16x16xi1>
    %43 = vector.broadcast %31 : i32 to vector<16x16xi32>
    %44 = arith.addi %33, %43 : vector<16x16xi32>
    %45 = arith.select %42, %44, %33 : vector<16x16xi1>, vector<16x16xi32>
    %c2_i32_17 = arith.constant 2 : i32
    %c0_i32_18 = arith.constant 0 : i32
    %46 = arith.cmpi eq, %c2_i32_17, %c0_i32_18 : i32
    %c1_i32_19 = arith.constant 1 : i32
    %47 = arith.select %46, %c1_i32_19, %c2_i32_17 : i32
    %48 = vector.broadcast %47 : i32 to vector<16x16xi32>
    %49 = arith.remsi %29, %48 : vector<16x16xi32>
    %c0_i32_20 = arith.constant 0 : i32
    %50 = vector.broadcast %c0_i32_20 : i32 to vector<16x16xi32>
    %51 = arith.cmpi ne, %49, %50 : vector<16x16xi32>
    %c0_i32_21 = arith.constant 0 : i32
    %52 = vector.broadcast %c0_i32_21 : i32 to vector<16x16xi32>
    %53 = arith.cmpi slt, %49, %52 : vector<16x16xi32>
    %c0_i32_22 = arith.constant 0 : i32
    %54 = arith.cmpi slt, %47, %c0_i32_22 : i32
    %55 = vector.broadcast %54 : i1 to vector<16x16xi1>
    %56 = vector.broadcast %55 : vector<16x16xi1> to vector<16x16xi1>
    %57 = arith.xori %53, %56 : vector<16x16xi1>
    %58 = arith.andi %57, %51 : vector<16x16xi1>
    %59 = vector.broadcast %47 : i32 to vector<16x16xi32>
    %60 = arith.addi %49, %59 : vector<16x16xi32>
    %61 = arith.select %58, %60, %49 : vector<16x16xi1>, vector<16x16xi32>
    %62 = arith.cmpi eq, %45, %61 : vector<16x16xi32>
    %63 = vector.extract_strided_slice %27 {offsets = [0, 0], sizes = [16, 8], strides = [1, 1]} : vector<16x96xf32> to vector<16x8xf32>
    %cst_23 = arith.constant 0.353553385 : f32
    %64 = vector.broadcast %cst_23 : f32 to vector<16x8xf32>
    %65 = arith.mulf %63, %64 : vector<16x8xf32>
    %66 = vector.extract_strided_slice %27 {offsets = [0, 32], sizes = [16, 8], strides = [1, 1]} : vector<16x96xf32> to vector<16x8xf32>
    %67 = vector.extract_strided_slice %27 {offsets = [0, 64], sizes = [16, 8], strides = [1, 1]} : vector<16x96xf32> to vector<16x8xf32>
    %cst_24 = arith.constant dense<0.000000e+00> : vector<16x16xf32>
    %68 = tpu.matmul %65, %66, %cst_24 {dimension_numbers = #tpu.dot_dimension_numbers<[1], [1], [0], [0], [0, 0, 1, 0], [], []>} : vector<16x8xf32>, vector<16x8xf32>, vector<16x16xf32> -> vector<16x16xf32>
    %cst_25 = arith.constant -1.000000e+30 : f32
    %69 = vector.broadcast %cst_25 : f32 to vector<16x16xf32>
    %70 = arith.select %62, %68, %69 : vector<16x16xi1>, vector<16x16xf32>
    %cst_26 = arith.constant dense<0xFF800000> : vector<16xf32>
    %71 = vector.multi_reduction <maximumf>, %70, %cst_26 [1] : vector<16x16xf32> to vector<16xf32>
    %72 = vector.shape_cast %71 : vector<16xf32> to vector<16x1xf32>
    %73 = vector.broadcast %72 : vector<16x1xf32> to vector<16x16xf32>
    %74 = arith.subf %70, %73 : vector<16x16xf32>
    %75 = math.exp %74 : vector<16x16xf32>
    %cst_27 = arith.constant dense<0.000000e+00> : vector<16xf32>
    %76 = vector.multi_reduction <add>, %75, %cst_27 [1] : vector<16x16xf32> to vector<16xf32>
    %77 = vector.shape_cast %76 : vector<16xf32> to vector<16x1xf32>
    %cst_28 = arith.constant dense<0.000000e+00> : vector<16x8xf32>
    %78 = tpu.matmul %75, %67, %cst_28 {dimension_numbers = #tpu.dot_dimension_numbers<[1], [0], [0], [1], [0, 0, 1, 1], [], []>} : vector<16x16xf32>, vector<16x8xf32>, vector<16x8xf32> -> vector<16x8xf32>
    %79 = vector.broadcast %77 : vector<16x1xf32> to vector<16x8xf32>
    %80 = arith.divf %78, %79 : vector<16x8xf32>
    %81 = vector.extract_strided_slice %27 {offsets = [0, 8], sizes = [16, 8], strides = [1, 1]} : vector<16x96xf32> to vector<16x8xf32>
    %cst_29 = arith.constant 0.353553385 : f32
    %82 = vector.broadcast %cst_29 : f32 to vector<16x8xf32>
    %83 = arith.mulf %81, %82 : vector<16x8xf32>
    %84 = vector.extract_strided_slice %27 {offsets = [0, 40], sizes = [16, 8], strides = [1, 1]} : vector<16x96xf32> to vector<16x8xf32>
    %85 = vector.extract_strided_slice %27 {offsets = [0, 72], sizes = [16, 8], strides = [1, 1]} : vector<16x96xf32> to vector<16x8xf32>
    %cst_30 = arith.constant dense<0.000000e+00> : vector<16x16xf32>
    %86 = tpu.matmul %83, %84, %cst_30 {dimension_numbers = #tpu.dot_dimension_numbers<[1], [1], [0], [0], [0, 0, 1, 0], [], []>} : vector<16x8xf32>, vector<16x8xf32>, vector<16x16xf32> -> vector<16x16xf32>
    %cst_31 = arith.constant -1.000000e+30 : f32
    %87 = vector.broadcast %cst_31 : f32 to vector<16x16xf32>
    %88 = arith.select %62, %86, %87 : vector<16x16xi1>, vector<16x16xf32>
    %cst_32 = arith.constant dense<0xFF800000> : vector<16xf32>
    %89 = vector.multi_reduction <maximumf>, %88, %cst_32 [1] : vector<16x16xf32> to vector<16xf32>
    %90 = vector.shape_cast %89 : vector<16xf32> to vector<16x1xf32>
    %91 = vector.broadcast %90 : vector<16x1xf32> to vector<16x16xf32>
    %92 = arith.subf %88, %91 : vector<16x16xf32>
    %93 = math.exp %92 : vector<16x16xf32>
    %cst_33 = arith.constant dense<0.000000e+00> : vector<16xf32>
    %94 = vector.multi_reduction <add>, %93, %cst_33 [1] : vector<16x16xf32> to vector<16xf32>
    %95 = vector.shape_cast %94 : vector<16xf32> to vector<16x1xf32>
    %cst_34 = arith.constant dense<0.000000e+00> : vector<16x8xf32>
    %96 = tpu.matmul %93, %85, %cst_34 {dimension_numbers = #tpu.dot_dimension_numbers<[1], [0], [0], [1], [0, 0, 1, 1], [], []>} : vector<16x16xf32>, vector<16x8xf32>, vector<16x8xf32> -> vector<16x8xf32>
    %97 = vector.broadcast %95 : vector<16x1xf32> to vector<16x8xf32>
    %98 = arith.divf %96, %97 : vector<16x8xf32>
    %99 = vector.extract_strided_slice %27 {offsets = [0, 16], sizes = [16, 8], strides = [1, 1]} : vector<16x96xf32> to vector<16x8xf32>
    %cst_35 = arith.constant 0.353553385 : f32
    %100 = vector.broadcast %cst_35 : f32 to vector<16x8xf32>
    %101 = arith.mulf %99, %100 : vector<16x8xf32>
    %102 = vector.extract_strided_slice %27 {offsets = [0, 48], sizes = [16, 8], strides = [1, 1]} : vector<16x96xf32> to vector<16x8xf32>
    %103 = vector.extract_strided_slice %27 {offsets = [0, 80], sizes = [16, 8], strides = [1, 1]} : vector<16x96xf32> to vector<16x8xf32>
    %cst_36 = arith.constant dense<0.000000e+00> : vector<16x16xf32>
    %104 = tpu.matmul %101, %102, %cst_36 {dimension_numbers = #tpu.dot_dimension_numbers<[1], [1], [0], [0], [0, 0, 1, 0], [], []>} : vector<16x8xf32>, vector<16x8xf32>, vector<16x16xf32> -> vector<16x16xf32>
    %cst_37 = arith.constant -1.000000e+30 : f32
    %105 = vector.broadcast %cst_37 : f32 to vector<16x16xf32>
    %106 = arith.select %62, %104, %105 : vector<16x16xi1>, vector<16x16xf32>
    %cst_38 = arith.constant dense<0xFF800000> : vector<16xf32>
    %107 = vector.multi_reduction <maximumf>, %106, %cst_38 [1] : vector<16x16xf32> to vector<16xf32>
    %108 = vector.shape_cast %107 : vector<16xf32> to vector<16x1xf32>
    %109 = vector.broadcast %108 : vector<16x1xf32> to vector<16x16xf32>
    %110 = arith.subf %106, %109 : vector<16x16xf32>
    %111 = math.exp %110 : vector<16x16xf32>
    %cst_39 = arith.constant dense<0.000000e+00> : vector<16xf32>
    %112 = vector.multi_reduction <add>, %111, %cst_39 [1] : vector<16x16xf32> to vector<16xf32>
    %113 = vector.shape_cast %112 : vector<16xf32> to vector<16x1xf32>
    %cst_40 = arith.constant dense<0.000000e+00> : vector<16x8xf32>
    %114 = tpu.matmul %111, %103, %cst_40 {dimension_numbers = #tpu.dot_dimension_numbers<[1], [0], [0], [1], [0, 0, 1, 1], [], []>} : vector<16x16xf32>, vector<16x8xf32>, vector<16x8xf32> -> vector<16x8xf32>
    %115 = vector.broadcast %113 : vector<16x1xf32> to vector<16x8xf32>
    %116 = arith.divf %114, %115 : vector<16x8xf32>
    %117 = vector.extract_strided_slice %27 {offsets = [0, 24], sizes = [16, 8], strides = [1, 1]} : vector<16x96xf32> to vector<16x8xf32>
    %cst_41 = arith.constant 0.353553385 : f32
    %118 = vector.broadcast %cst_41 : f32 to vector<16x8xf32>
    %119 = arith.mulf %117, %118 : vector<16x8xf32>
    %120 = vector.extract_strided_slice %27 {offsets = [0, 56], sizes = [16, 8], strides = [1, 1]} : vector<16x96xf32> to vector<16x8xf32>
    %121 = vector.extract_strided_slice %27 {offsets = [0, 88], sizes = [16, 8], strides = [1, 1]} : vector<16x96xf32> to vector<16x8xf32>
    %cst_42 = arith.constant dense<0.000000e+00> : vector<16x16xf32>
    %122 = tpu.matmul %119, %120, %cst_42 {dimension_numbers = #tpu.dot_dimension_numbers<[1], [1], [0], [0], [0, 0, 1, 0], [], []>} : vector<16x8xf32>, vector<16x8xf32>, vector<16x16xf32> -> vector<16x16xf32>
    %cst_43 = arith.constant -1.000000e+30 : f32
    %123 = vector.broadcast %cst_43 : f32 to vector<16x16xf32>
    %124 = arith.select %62, %122, %123 : vector<16x16xi1>, vector<16x16xf32>
    %cst_44 = arith.constant dense<0xFF800000> : vector<16xf32>
    %125 = vector.multi_reduction <maximumf>, %124, %cst_44 [1] : vector<16x16xf32> to vector<16xf32>
    %126 = vector.shape_cast %125 : vector<16xf32> to vector<16x1xf32>
    %127 = vector.broadcast %126 : vector<16x1xf32> to vector<16x16xf32>
    %128 = arith.subf %124, %127 : vector<16x16xf32>
    %129 = math.exp %128 : vector<16x16xf32>
    %cst_45 = arith.constant dense<0.000000e+00> : vector<16xf32>
    %130 = vector.multi_reduction <add>, %129, %cst_45 [1] : vector<16x16xf32> to vector<16xf32>
    %131 = vector.shape_cast %130 : vector<16xf32> to vector<16x1xf32>
    %cst_46 = arith.constant dense<0.000000e+00> : vector<16x8xf32>
    %132 = tpu.matmul %129, %121, %cst_46 {dimension_numbers = #tpu.dot_dimension_numbers<[1], [0], [0], [1], [0, 0, 1, 1], [], []>} : vector<16x16xf32>, vector<16x8xf32>, vector<16x8xf32> -> vector<16x8xf32>
    %133 = vector.broadcast %131 : vector<16x1xf32> to vector<16x8xf32>
    %134 = arith.divf %132, %133 : vector<16x8xf32>
    %135 = tpu.concatenate %80, %98, %116, %134 in 1 : vector<16x8xf32>, vector<16x8xf32>, vector<16x8xf32>, vector<16x8xf32> -> vector<16x32xf32>
    %c0_47 = arith.constant 0 : index
    %c0_48 = arith.constant 0 : index
    %136 = vector.load %arg6[%c0_47, %c0_48] : memref<32x32xf32, #tpu.memory_space<vmem>>, vector<32x32xf32>
    %cst_49 = arith.constant dense<0.000000e+00> : vector<16x32xf32>
    %137 = tpu.matmul %135, %136, %cst_49 {dimension_numbers = #tpu.dot_dimension_numbers<[1], [0], [0], [1], [0, 0, 1, 1], [], []>} : vector<16x32xf32>, vector<32x32xf32>, vector<16x32xf32> -> vector<16x32xf32>
    %c0_50 = arith.constant 0 : index
    %c0_51 = arith.constant 0 : index
    %138 = vector.load %arg7[%c0_50, %c0_51] : memref<1x32xf32, #tpu.memory_space<vmem>>, vector<1x32xf32>
    %139 = vector.broadcast %138 : vector<1x32xf32> to vector<16x32xf32>
    %140 = arith.addf %137, %139 : vector<16x32xf32>
    %141 = arith.addf %140, %0 : vector<16x32xf32>
    %c0_52 = arith.constant 0 : index
    %c0_53 = arith.constant 0 : index
    %142 = vector.load %arg8[%c0_52, %c0_53] : memref<1x32xf32, #tpu.memory_space<vmem>>, vector<1x32xf32>
    %c0_54 = arith.constant 0 : index
    %c0_55 = arith.constant 0 : index
    %143 = vector.load %arg9[%c0_54, %c0_55] : memref<1x32xf32, #tpu.memory_space<vmem>>, vector<1x32xf32>
    %cst_56 = arith.constant dense<0.000000e+00> : vector<16xf32>
    %144 = vector.multi_reduction <add>, %141, %cst_56 [1] : vector<16x32xf32> to vector<16xf32>
    %145 = vector.shape_cast %144 : vector<16xf32> to vector<16x1xf32>
    %cst_57 = arith.constant 3.200000e+01 : f32
    %146 = vector.broadcast %cst_57 : f32 to vector<16x1xf32>
    %147 = arith.divf %145, %146 : vector<16x1xf32>
    %148 = vector.broadcast %147 : vector<16x1xf32> to vector<16x32xf32>
    %149 = arith.subf %141, %148 : vector<16x32xf32>
    %150 = arith.mulf %149, %149 : vector<16x32xf32>
    %cst_58 = arith.constant dense<0.000000e+00> : vector<16xf32>
    %151 = vector.multi_reduction <add>, %150, %cst_58 [1] : vector<16x32xf32> to vector<16xf32>
    %152 = vector.shape_cast %151 : vector<16xf32> to vector<16x1xf32>
    %cst_59 = arith.constant 3.200000e+01 : f32
    %153 = vector.broadcast %cst_59 : f32 to vector<16x1xf32>
    %154 = arith.divf %152, %153 : vector<16x1xf32>
    %cst_60 = arith.constant 9.99999997E-7 : f32
    %155 = vector.broadcast %cst_60 : f32 to vector<16x1xf32>
    %156 = arith.addf %154, %155 : vector<16x1xf32>
    %157 = math.rsqrt %156 : vector<16x1xf32>
    %158 = vector.broadcast %157 : vector<16x1xf32> to vector<16x32xf32>
    %159 = arith.mulf %149, %158 : vector<16x32xf32>
    %160 = vector.broadcast %142 : vector<1x32xf32> to vector<16x32xf32>
    %161 = arith.mulf %159, %160 : vector<16x32xf32>
    %162 = vector.broadcast %143 : vector<1x32xf32> to vector<16x32xf32>
    %163 = arith.addf %161, %162 : vector<16x32xf32>
    %c0_61 = arith.constant 0 : index
    %c0_62 = arith.constant 0 : index
    %164 = vector.load %arg10[%c0_61, %c0_62] : memref<32x128xf32, #tpu.memory_space<vmem>>, vector<32x128xf32>
    %cst_63 = arith.constant dense<0.000000e+00> : vector<16x128xf32>
    %165 = tpu.matmul %163, %164, %cst_63 {dimension_numbers = #tpu.dot_dimension_numbers<[1], [0], [0], [1], [0, 0, 1, 1], [], []>} : vector<16x32xf32>, vector<32x128xf32>, vector<16x128xf32> -> vector<16x128xf32>
    %c0_64 = arith.constant 0 : index
    %c0_65 = arith.constant 0 : index
    %166 = vector.load %arg11[%c0_64, %c0_65] : memref<1x128xf32, #tpu.memory_space<vmem>>, vector<1x128xf32>
    %167 = vector.broadcast %166 : vector<1x128xf32> to vector<16x128xf32>
    %168 = arith.addf %165, %167 : vector<16x128xf32>
    %cst_66 = arith.constant 5.000000e-01 : f32
    %169 = vector.broadcast %cst_66 : f32 to vector<16x128xf32>
    %170 = arith.mulf %169, %168 : vector<16x128xf32>
    %cst_67 = arith.constant 0.707106769 : f32
    %171 = vector.broadcast %cst_67 : f32 to vector<16x128xf32>
    %172 = arith.mulf %168, %171 : vector<16x128xf32>
    %173 = math.erf %172 : vector<16x128xf32>
    %cst_68 = arith.constant 1.000000e+00 : f32
    %174 = vector.broadcast %cst_68 : f32 to vector<16x128xf32>
    %175 = arith.addf %174, %173 : vector<16x128xf32>
    %176 = arith.mulf %170, %175 : vector<16x128xf32>
    %c0_69 = arith.constant 0 : index
    %c0_70 = arith.constant 0 : index
    %177 = vector.load %arg12[%c0_69, %c0_70] : memref<128x32xf32, #tpu.memory_space<vmem>>, vector<128x32xf32>
    %cst_71 = arith.constant dense<0.000000e+00> : vector<16x32xf32>
    %178 = tpu.matmul %176, %177, %cst_71 {dimension_numbers = #tpu.dot_dimension_numbers<[1], [0], [0], [1], [0, 0, 1, 1], [], []>} : vector<16x128xf32>, vector<128x32xf32>, vector<16x32xf32> -> vector<16x32xf32>
    %c0_72 = arith.constant 0 : index
    %c0_73 = arith.constant 0 : index
    %179 = vector.load %arg13[%c0_72, %c0_73] : memref<1x32xf32, #tpu.memory_space<vmem>>, vector<1x32xf32>
    %180 = vector.broadcast %179 : vector<1x32xf32> to vector<16x32xf32>
    %181 = arith.addf %178, %180 : vector<16x32xf32>
    %cst_74 = arith.constant 5.000000e-01 : f32
    %182 = vector.broadcast %cst_74 : f32 to vector<16x32xf32>
    %183 = arith.mulf %182, %181 : vector<16x32xf32>
    %cst_75 = arith.constant 0.707106769 : f32
    %184 = vector.broadcast %cst_75 : f32 to vector<16x32xf32>
    %185 = arith.mulf %181, %184 : vector<16x32xf32>
    %186 = math.erf %185 : vector<16x32xf32>
    %cst_76 = arith.constant 1.000000e+00 : f32
    %187 = vector.broadcast %cst_76 : f32 to vector<16x32xf32>
    %188 = arith.addf %187, %186 : vector<16x32xf32>
    %189 = arith.mulf %183, %188 : vector<16x32xf32>
    %190 = arith.addf %141, %189 : vector<16x32xf32>
    %c0_77 = arith.constant 0 : index
    %c0_78 = arith.constant 0 : index
    %191 = vector.load %arg14[%c0_77, %c0_78] : memref<16x32xf32, #tpu.memory_space<vmem>>, vector<16x32xf32>
    tpu.vector_store %arg14[%c0_77, %c0_78], %190 {strides = array<i32>} : memref<16x32xf32, #tpu.memory_space<vmem>>, vector<16x32xf32>,
    return
  }
  func.func @transform_0(%arg0: i32) -> (i32, i32) {
    %c0_i32 = arith.constant 0 : i32
    %c0_i32_0 = arith.constant 0 : i32
    %c0_i32_1 = arith.constant 0 : i32
    return %c0_i32, %c0_i32_0 : i32, i32
  }
  func.func @transform_1(%arg0: i32) -> (i32, i32) {
    %c0_i32 = arith.constant 0 : i32
    %c0_i32_0 = arith.constant 0 : i32
    %c0_i32_1 = arith.constant 0 : i32
    return %c0_i32, %c0_i32_0 : i32, i32
  }
  func.func @transform_2(%arg0: i32) -> (i32, i32) {
    %c0_i32 = arith.constant 0 : i32
    %c0_i32_0 = arith.constant 0 : i32
    %c0_i32_1 = arith.constant 0 : i32
    return %c0_i32, %c0_i32_0 : i32, i32
  }
  func.func @transform_3(%arg0: i32) -> (i32, i32) {
    %c0_i32 = arith.constant 0 : i32
    %c0_i32_0 = arith.constant 0 : i32
    %c0_i32_1 = arith.constant 0 : i32
    return %c0_i32, %c0_i32_0 : i32, i32
  }
  func.func @transform_4(%arg0: i32) -> (i32, i32) {
    %c0_i32 = arith.constant 0 : i32
    %c0_i32_0 = arith.constant 0 : i32
    %c0_i32_1 = arith.constant 0 : i32
    return %c0_i32, %c0_i32_0 : i32, i32
  }
  func.func @transform_5(%arg0: i32) -> (i32, i32) {
    %c0_i32 = arith.constant 0 : i32
    %c0_i32_0 = arith.constant 0 : i32
    %c0_i32_1 = arith.constant 0 : i32
    return %c0_i32, %c0_i32_0 : i32, i32
  }
  func.func @transform_6(%arg0: i32) -> (i32, i32) {
    %c0_i32 = arith.constant 0 : i32
    %c0_i32_0 = arith.constant 0 : i32
    %c0_i32_1 = arith.constant 0 : i32
    return %c0_i32, %c0_i32_0 : i32, i32
  }
  func.func @transform_7(%arg0: i32) -> (i32, i32) {
    %c0_i32 = arith.constant 0 : i32
    %c0_i32_0 = arith.constant 0 : i32
    %c0_i32_1 = arith.constant 0 : i32
    return %c0_i32, %c0_i32_0 : i32, i32
  }
  func.func @transform_8(%arg0: i32) -> (i32, i32) {
    %c0_i32 = arith.constant 0 : i32
    %c0_i32_0 = arith.constant 0 : i32
    %c0_i32_1 = arith.constant 0 : i32
    return %c0_i32, %c0_i32_0 : i32, i32
  }
  func.func @transform_9(%arg0: i32) -> (i32, i32) {
    %c0_i32 = arith.constant 0 : i32
    %c0_i32_0 = arith.constant 0 : i32
    %c0_i32_1 = arith.constant 0 : i32
    return %c0_i32, %c0_i32_0 : i32, i32
  }
  func.func @transform_10(%arg0: i32) -> (i32, i32) {
    %c0_i32 = arith.constant 0 : i32
    %c0_i32_0 = arith.constant 0 : i32
    %c0_i32_1 = arith.constant 0 : i32
    return %c0_i32, %c0_i32_0 : i32, i32
  }
  func.func @transform_11(%arg0: i32) -> (i32, i32) {
    %c0_i32 = arith.constant 0 : i32
    %c0_i32_0 = arith.constant 0 : i32
    %c0_i32_1 = arith.constant 0 : i32
    return %c0_i32, %c0_i32_0 : i32, i32
  }
  func.func @transform_12(%arg0: i32) -> (i32, i32) {
    %c0_i32 = arith.constant 0 : i32
    %c0_i32_0 = arith.constant 0 : i32
    %c0_i32_1 = arith.constant 0 : i32
    return %c0_i32, %c0_i32_0 : i32, i32
  }
  func.func @transform_13(%arg0: i32) -> (i32, i32) {
    %c0_i32 = arith.constant 0 : i32
    %c0_i32_0 = arith.constant 0 : i32
    %c0_i32_1 = arith.constant 0 : i32
    return %c0_i32, %c0_i32_0 : i32, i32
  }
}

</mosaic_0001>

<llo_original>
// kernel: transformer_block.1
$region0: #{transformer_block.1}
  #allocation0 [shape = 'u32[]', space=smem, size = 0x4, offset = 0x4, fixed_abs, tag = 'smem constant byte address 0x4 - core index']
  #allocation1 [shape = 'u32[144,128]{1,0:T(1,128)}', space=vmem, size = 0x12000, scoped, tag = 'internal scratch']
  %s0 = inlined_call_operand.vmem [shape: f32[16,32], index: 0, kind: input, shape index: {}]
  %s1 = inlined_call_operand.vmem [shape: f32[1,32], index: 1, kind: input, shape index: {}]
  %s2 = inlined_call_operand.vmem [shape: f32[1,32], index: 2, kind: input, shape index: {}]
  %s3 = inlined_call_operand.vmem [shape: f32[32,96], index: 3, kind: input, shape index: {}]
  %s4 = inlined_call_operand.vmem [shape: f32[1,96], index: 4, kind: input, shape index: {}]
  %s5 = inlined_call_operand.vmem [shape: f32[32,32], index: 5, kind: input, shape index: {}]
  %s6 = inlined_call_operand.vmem [shape: f32[1,32], index: 6, kind: input, shape index: {}]
  %s7 = inlined_call_operand.vmem [shape: f32[1,32], index: 7, kind: input, shape index: {}]
  %s8 = inlined_call_operand.vmem [shape: f32[1,32], index: 8, kind: input, shape index: {}]
  %s9 = inlined_call_operand.vmem [shape: f32[32,128], index: 9, kind: input, shape index: {}]
  %s10 = inlined_call_operand.vmem [shape: f32[1,128], index: 10, kind: input, shape index: {}]
  %s11 = inlined_call_operand.vmem [shape: f32[128,32], index: 11, kind: input, shape index: {}]
  %s12 = inlined_call_operand.vmem [shape: f32[1,32], index: 12, kind: input, shape index: {}]
  %s13 = inlined_call_operand.hbm [shape: f32[16,32], index: 13, kind: output, shape index: {}]
  %s14 = sld [smem:[#allocation0]]
  $region62: #{transformer_block.1} parent=0
    _
  %s16 = ssub.s32 1, %s14
  %s17 = scalar_select 0, %s16, %s14
  $region1: #{transformer_block.1} parent=0
    #allocation2 [shape = 'u8[8192]{0}', space=vmem, size = 0x2000, scoped, tag = 'output window, operand 0, single buffered']
    #allocation3 [shape = 's32[1]{0}', space=sflag, size = 0x4, scoped, tag = 'scoped memory for transformer_block.1']
    %18 = vsyncpa [#allocation3], 0
    // Predicated region
    $region2: #{transformer_block.1} parent=1 // pred_check
      _
    $region3: #{transformer_block.1} parent=1 // pred_check_branch
      %20 = sbr.rel (0) target = $region5
    $region4: #{transformer_block.1} parent=1 // pred_region
      _
    $region5: #{transformer_block.1} parent=1 // pred_fallthru
      _
    // Predicated region
    $region6: #{transformer_block.1} parent=1 // pred_check
      _
    $region7: #{transformer_block.1} parent=1 // pred_check_branch
      %22 = sbr.rel (0) target = $region9
    $region8: #{transformer_block.1} parent=1 // pred_region
      _
    $region9: #{transformer_block.1} parent=1 // pred_fallthru
      _
    // Predicated region
    $region10: #{transformer_block.1} parent=1 // pred_check
      _
    $region11: #{transformer_block.1} parent=1 // pred_check_branch
      %24 = sbr.rel (0) target = $region13
    $region12: #{transformer_block.1} parent=1 // pred_region
      _
    $region13: #{transformer_block.1} parent=1 // pred_fallthru
      _
    // Predicated region
    $region14: #{transformer_block.1} parent=1 // pred_check
      _
    $region15: #{transformer_block.1} parent=1 // pred_check_branch
      %26 = sbr.rel (0) target = $region17
    $region16: #{transformer_block.1} parent=1 // pred_region
      _
    $region17: #{transformer_block.1} parent=1 // pred_fallthru
      _
    // Predicated region
    $region18: #{transformer_block.1} parent=1 // pred_check
      _
    $region19: #{transformer_block.1} parent=1 // pred_check_branch
      %28 = sbr.rel (0) target = $region21
    $region20: #{transformer_block.1} parent=1 // pred_region
      _
    $region21: #{transformer_block.1} parent=1 // pred_fallthru
      _
    // Predicated region
    $region22: #{transformer_block.1} parent=1 // pred_check
      _
    $region23: #{transformer_block.1} parent=1 // pred_check_branch
      %30 = sbr.rel (0) target = $region25
    $region24: #{transformer_block.1} parent=1 // pred_region
      _
    $region25: #{transformer_block.1} parent=1 // pred_fallthru
      _
    // Predicated region
    $region26: #{transformer_block.1} parent=1 // pred_check
      _
    $region27: #{transformer_block.1} parent=1 // pred_check_branch
      %32 = sbr.rel (0) target = $region29
    $region28: #{transformer_block.1} parent=1 // pred_region
      _
    $region29: #{transformer_block.1} parent=1 // pred_fallthru
      _
    // Predicated region
    $region30: #{transformer_block.1} parent=1 // pred_check
      _
    $region31: #{transformer_block.1} parent=1 // pred_check_branch
      %34 = sbr.rel (0) target = $region33
    $region32: #{transformer_block.1} parent=1 // pred_region
      _
    $region33: #{transformer_block.1} parent=1 // pred_fallthru
      _
    // Predicated region
    $region34: #{transformer_block.1} parent=1 // pred_check
      _
    $region35: #{transformer_block.1} parent=1 // pred_check_branch
      %36 = sbr.rel (0) target = $region37
    $region36: #{transformer_block.1} parent=1 // pred_region
      _
    $region37: #{transformer_block.1} parent=1 // pred_fallthru
      _
    // Predicated region
    $region38: #{transformer_block.1} parent=1 // pred_check
      _
    $region39: #{transformer_block.1} parent=1 // pred_check_branch
      %38 = sbr.rel (0) target = $region41
    $region40: #{transformer_block.1} parent=1 // pred_region
      _
    $region41: #{transformer_block.1} parent=1 // pred_fallthru
      _
    // Predicated region
    $region42: #{transformer_block.1} parent=1 // pred_check
      _
    $region43: #{transformer_block.1} parent=1 // pred_check_branch
      %40 = sbr.rel (0) target = $region45
    $region44: #{transformer_block.1} parent=1 // pred_region
      _
    $region45: #{transformer_block.1} parent=1 // pred_fallthru
      _
    // Predicated region
    $region46: #{transformer_block.1} parent=1 // pred_check
      _
    $region47: #{transformer_block.1} parent=1 // pred_check_branch
      %42 = sbr.rel (0) target = $region49
    $region48: #{transformer_block.1} parent=1 // pred_region
      _
    $region49: #{transformer_block.1} parent=1 // pred_fallthru
      _
    // Predicated region
    $region50: #{transformer_block.1} parent=1 // pred_check
      _
    $region51: #{transformer_block.1} parent=1 // pred_check_branch
      %44 = sbr.rel (0) target = $region53
    $region52: #{transformer_block.1} parent=1 // pred_region
      _
    $region53: #{transformer_block.1} parent=1 // pred_fallthru
      _
    %v45 = vld [vmem:[%s0] sm:$0xff]
    %v46 = vld [vmem:[%s0 + $0x8] sm:$0xff]
    %v47 = vld [vmem:[%s1] sm:$0x1]
    %v48 = vld [vmem:[%s2] sm:$0x1]
    %vm49 = vcmask 261120
    %v50 = vsel %vm49, %v45, 0.0
    %51 = vadd.xlane.f32.xlu0 %v50
    %v52 = vpop.xlane.xlu0 %51
    %v53 = vsel %vm49, %v46, 0.0
    %54 = vadd.xlane.f32.xlu0 %v53
    %v55 = vpop.xlane.xlu0 %54
    %v56 = vrcp.pop 32.0
    %v57 = vmul.f32 %v52, %v56
    %v58 = vmul.f32 %v55, %v56
    %v59 = vsub.f32 %v45, %v57
    %v60 = vsub.f32 %v46, %v58
    %v61 = vmul.f32 %v59, %v59
    %v62 = vmul.f32 %v60, %v60
    %v63 = vsel %vm49, %v61, 0.0
    %64 = vadd.xlane.f32.xlu0 %v63
    %v65 = vpop.xlane.xlu0 %64
    %v66 = vsel %vm49, %v62, 0.0
    %67 = vadd.xlane.f32.xlu0 %v66
    %v68 = vpop.xlane.xlu0 %67
    %v69 = vmul.f32 %v65, %v56
    %v70 = vmul.f32 %v68, %v56
    %v71 = vadd.f32 %v69, 1e-06
    %v72 = vadd.f32 %v70, 1e-06
    %v73 = vrsqrt.pop %v71
    %v74 = vrsqrt.pop %v72
    %v75 = vmul.f32 %v59, %v73
    %v76 = vmul.f32 %v60, %v74
    %v78 = vlaneseq
    %v79 = vshrl.u32 %v78, 7
    %v80 = vsub.s32 0, %v79
    %v81 = vrot.slane %v47, %v80
    %v83 = vmul.f32 %v75, %v81
    %v84 = vmul.f32 %v76, %v81
    %v86 = vlaneseq
    %v87 = vshrl.u32 %v86, 7
    %v88 = vsub.s32 0, %v87
    %v89 = vrot.slane %v48, %v88
    %v91 = vadd.f32 %v83, %v89
    %v92 = vadd.f32 %v84, %v89
    %v93 = vld [vmem:[%s3] sm:$0xff]
    %v94 = vld [vmem:[%s3 + $0x8] sm:$0xff]
    %v95 = vld [vmem:[%s3 + $0x10] sm:$0xff]
    %v96 = vld [vmem:[%s3 + $0x18] sm:$0xff]
    %v97 = vld [vmem:[%s4] sm:$0x1]
    %v99 = vlaneseq
    %v100 = vshrl.u32 %v99, 7
    %v101 = vsub.s32 0, %v100
    %v102 = vrot.slane %v97, %v101
    %v105 = vsel %vm49, %v91, 0
    %v108 = vsel %vm49, %v92, 0
    %110 = vmatprep.subr.mxu0 0.0
    %111 = vmatpush1.msra.mxu0 %v93
    %112 = vmatprep.subr.mxu0 0.0
    %113 = vmatpush1.msra.mxu0 %v94
    %114 = vmatprep.subr.mxu0 0.0
    %115 = vmatpush1.msra.mxu0 %v95
    %116 = vmatprep.subr.mxu0 0.0
    %117 = vmatpush1.msra.mxu0 %v96
    %118 = vmatprep.subr.mxu0 0.0
    %119 = vmatpush1.msra.mxu0 0.0
    %120 = vmatprep.subr.mxu0 0.0
    %121 = vmatpush1.msra.mxu0 0.0
    %122 = vmatprep.subr.mxu0 0.0
    %123 = vmatpush1.msra.mxu0 0.0
    %124 = vmatprep.subr.mxu0 0.0
    %125 = vmatpush1.msra.mxu0 0.0
    %126 = vmatprep.subr.mxu0 0.0
    %127 = vmatpush1.msra.mxu0 0.0
    %128 = vmatprep.subr.mxu0 0.0
    %129 = vmatpush1.msra.mxu0 0.0
    %130 = vmatprep.subr.mxu0 0.0
    %131 = vmatpush1.msra.mxu0 0.0
    %132 = vmatprep.subr.mxu0 0.0
    %133 = vmatpush1.msra.mxu0 0.0
    %134 = vmatprep.subr.mxu0 0.0
    %135 = vmatpush1.msra.mxu0 0.0
    %136 = vmatprep.subr.mxu0 0.0
    %137 = vmatpush1.msra.mxu0 0.0
    %138 = vmatprep.subr.mxu0 0.0
    %139 = vmatpush1.msra.mxu0 0.0
    %140 = vmatprep.subr.mxu0 0.0
    %141 = vmatpush1.msra.mxu0 0.0
    %142 = vmatprep.subr.mxu0 0.0
    %143 = vmatpush1.msra.mxu0 0.0
    %144 = vmatprep.subr.mxu0 0.0
    %145 = vmatpush1.msra.mxu0 0.0
    %146 = vmatprep.subr.mxu0 0.0
    %147 = vmatpush1.msra.mxu0 0.0
    %148 = vmatprep.subr.mxu0 0.0
    %149 = vmatpush1.msra.mxu0 0.0
    %150 = vmatprep.subr.mxu0 0.0
    %151 = vmatpush1.msra.mxu0 0.0
    %152 = vmatprep.subr.mxu0 0.0
    %153 = vmatpush1.msra.mxu0 0.0
    %154 = vmatprep.subr.mxu0 0.0
    %155 = vmatpush1.msra.mxu0 0.0
    %156 = vmatprep.subr.mxu0 0.0
    %157 = vmatpush1.msra.mxu0 0.0
    %158 = vmatprep.subr.mxu0 0.0
    %159 = vmatpush1.msra.mxu0 0.0
    %160 = vmatprep.subr.mxu0 0.0
    %161 = vmatpush1.msra.mxu0 0.0
    %162 = vmatprep.subr.mxu0 0.0
    %163 = vmatpush1.msra.mxu0 0.0
    %164 = vmatprep.subr.mxu0 0.0
    %165 = vmatpush1.msra.mxu0 0.0
    %166 = vmatprep.subr.mxu0 0.0
    %167 = vmatpush1.msra.mxu0 0.0
    %168 = vmatprep.subr.mxu0 0.0
    %169 = vmatpush1.msra.mxu0 0.0
    %170 = vmatprep.subr.mxu0 0.0
    %171 = vmatpush1.msra.mxu0 0.0
    %172 = vmatprep.subr.mxu0 0.0
    %173 = vmatpush1.msra.mxu0 0.0
    %174 = vmatprep.mubr.f32.mxu0 0.0
    %175 = vmatmul.mubr.f32.gmra.mrb[0].mxu0 %v105
    %v176 = vpop.f32.mrb[0].mxu0
    %v177 = vadd.f32 %v102, %v176
    %v178 = vpop.f32.mrb[0].mxu0
    %179 = vmatprep.mubr.f32.mxu0 0.0
    %180 = vmatmul.mubr.f32.gmra.mrb[0].mxu0 %v108
    %v181 = vpop.f32.mrb[0].mxu0
    %v182 = vadd.f32 %v102, %v181
    %v183 = vpop.f32.mrb[0].mxu0
    %184 = vdwg.mxu0
    %v185 = vlaneseq
    %v186 = vshrl.u32 %v185, 7
    %v187 = vadd.s32 %v186, 8
    %v188 = vlaneseq
    %v189 = vand.u32 %v188, 127
    %vm190 = vcmp.lt.s32.totalorder %v186, 0
    %v191 = vsub.s32 0, %v186
    %v192 = vsel %vm190, %v191, %v186
    %v193 = vshrl.u32 %v192, 1
    %v194 = vand.u32 %v192, 1
    %v195 = vsub.s32 0, %v194
    %v196 = vsel %vm190, %v195, %v194
    %vm197 = vcmp.lt.s32.totalorder %v187, 0
    %v198 = vsub.s32 0, %v187
    %v199 = vsel %vm197, %v198, %v187
    %v200 = vshrl.u32 %v199, 1
    %v201 = vand.u32 %v199, 1
    %v202 = vsub.s32 0, %v201
    %v203 = vsel %vm197, %v202, %v201
    %vm204 = vcmp.ne.s32.totalorder %v196, 0
    %vm205 = vcmp.ne.s32.totalorder %v203, 0
    %vm206 = vcmp.lt.s32.totalorder %v196, 0
    %vm207 = vcmp.lt.s32.totalorder %v203, 0
    %vm208 = vmand %vm206, %vm204
    %vm209 = vmand %vm207, %vm205
    %v210 = vadd.s32 %v196, 2
    %v211 = vadd.s32 %v203, 2
    %v212 = vsel %vm208, %v210, %v196
    %v213 = vsel %vm209, %v211, %v203
    %vm214 = vcmp.lt.s32.totalorder %v189, 0
    %v215 = vsub.s32 0, %v189
    %v216 = vsel %vm214, %v215, %v189
    %v217 = vshrl.u32 %v216, 1
    %v218 = vand.u32 %v216, 1
    %v219 = vsub.s32 0, %v218
    %v220 = vsel %vm214, %v219, %v218
    %vm221 = vcmp.ne.s32.totalorder %v220, 0
    %vm222 = vcmp.lt.s32.totalorder %v220, 0
    %vm223 = vmand %vm222, %vm221
    %v224 = vadd.s32 %v220, 2
    %v225 = vsel %vm223, %v224, %v220
    %vm226 = vcmp.eq.s32.totalorder %v212, %v225
    %vm227 = vcmp.eq.s32.totalorder %v213, %v225
    %v228 = vmul.f32 %v177, 0.35355338
    %v229 = vmul.f32 %v182, 0.35355338
    %232 = vrot.lane.b32.xlu0 %v177, 96
    %v233 = vpop.permute.xlu0 %232
    %234 = vrot.lane.b32.xlu0 %v182, 96
    %v235 = vpop.permute.xlu0 %234
    %vm236 = vcmask 64512
    %v238 = vsel %vm236, %v228, 0
    %v241 = vsel %vm236, %v229, 0
    %v243 = vsel %vm236, %v233, 0
    %v245 = vsel %vm236, %v235, 0
    %247 = vmatprep.subr.mxu0 0.0
    %248 = vmatpush1.xpose.msra.mxu0 %v243
    %249 = vmatprep.subr.mxu0 0.0
    %250 = vmatpush1.xpose.msra.mxu0 %v245
    %251 = vmatprep.subr.mxu0 0.0
    %252 = vmatpush1.xpose.msra.mxu0 0.0
    %253 = vmatprep.subr.mxu0 0.0
    %254 = vmatpush1.xpose.msra.mxu0 0.0
    %255 = vmatprep.subr.mxu0 0.0
    %256 = vmatpush1.xpose.msra.mxu0 0.0
    %257 = vmatprep.subr.mxu0 0.0
    %258 = vmatpush1.xpose.msra.mxu0 0.0
    %259 = vmatprep.subr.mxu0 0.0
    %260 = vmatpush1.xpose.msra.mxu0 0.0
    %261 = vmatprep.subr.mxu0 0.0
    %262 = vmatpush1.xpose.msra.mxu0 0.0
    %263 = vmatprep.subr.mxu0 0.0
    %264 = vmatpush1.xpose.msra.mxu0 0.0
    %265 = vmatprep.subr.mxu0 0.0
    %266 = vmatpush1.xpose.msra.mxu0 0.0
    %267 = vmatprep.subr.mxu0 0.0
    %268 = vmatpush1.xpose.msra.mxu0 0.0
    %269 = vmatprep.subr.mxu0 0.0
    %270 = vmatpush1.xpose.msra.mxu0 0.0
    %271 = vmatprep.subr.mxu0 0.0
    %272 = vmatpush1.xpose.msra.mxu0 0.0
    %273 = vmatprep.subr.mxu0 0.0
    %274 = vmatpush1.xpose.msra.mxu0 0.0
    %275 = vmatprep.subr.mxu0 0.0
    %276 = vmatpush1.xpose.msra.mxu0 0.0
    %277 = vmatprep.subr.mxu0 0.0
    %278 = vmatpush1.xpose.msra.mxu0 0.0
    %279 = vmatprep.subr.mxu0 0.0
    %280 = vmatpush1.xpose.msra.mxu0 0.0
    %281 = vmatprep.subr.mxu0 0.0
    %282 = vmatpush1.xpose.msra.mxu0 0.0
    %283 = vmatprep.subr.mxu0 0.0
    %284 = vmatpush1.xpose.msra.mxu0 0.0
    %285 = vmatprep.subr.mxu0 0.0
    %286 = vmatpush1.xpose.msra.mxu0 0.0
    %287 = vmatprep.subr.mxu0 0.0
    %288 = vmatpush1.xpose.msra.mxu0 0.0
    %289 = vmatprep.subr.mxu0 0.0
    %290 = vmatpush1.xpose.msra.mxu0 0.0
    %291 = vmatprep.subr.mxu0 0.0
    %292 = vmatpush1.xpose.msra.mxu0 0.0
    %293 = vmatprep.subr.mxu0 0.0
    %294 = vmatpush1.xpose.msra.mxu0 0.0
    %295 = vmatprep.subr.mxu0 0.0
    %296 = vmatpush1.xpose.msra.mxu0 0.0
    %297 = vmatprep.subr.mxu0 0.0
    %298 = vmatpush1.xpose.msra.mxu0 0.0
    %299 = vmatprep.subr.mxu0 0.0
    %300 = vmatpush1.xpose.msra.mxu0 0.0
    %301 = vmatprep.subr.mxu0 0.0
    %302 = vmatpush1.xpose.msra.mxu0 0.0
    %303 = vmatprep.subr.mxu0 0.0
    %304 = vmatpush1.xpose.msra.mxu0 0.0
    %305 = vmatprep.subr.mxu0 0.0
    %306 = vmatpush1.xpose.msra.mxu0 0.0
    %307 = vmatprep.subr.mxu0 0.0
    %308 = vmatpush1.xpose.msra.mxu0 0.0
    %309 = vmatprep.subr.mxu0 0.0
    %310 = vmatpush1.xpose.msra.mxu0 0.0
    %311 = vmatprep.mubr.f32.mxu0 0.0
    %312 = vmatmul.mubr.f32.gmra.mrb[0].mxu0 %v238
    %v313 = vpop.f32.mrb[0].mxu0
    %v314 = vadd.f32 0.0, %v313
    %v315 = vpop.f32.mrb[0].mxu0
    %316 = vmatprep.mubr.f32.mxu0 0.0
    %317 = vmatmul.mubr.f32.gmra.mrb[0].mxu0 %v241
    %v318 = vpop.f32.mrb[0].mxu0
    %v319 = vadd.f32 0.0, %v318
    %v320 = vpop.f32.mrb[0].mxu0
    %321 = vdwg.mxu0
    %v322 = vsel %vm226, %v314, -1e+30
    %v323 = vsel %vm227, %v319, -1e+30
    %vm324 = vcmask 130048
    %v325 = vsel %vm324, %v322, -inf
    %326 = vmax.xlane.f32.xlu0 %v325
    %v327 = vpop.xlane.xlu0 %326
    %v328 = vsel %vm324, %v323, -inf
    %329 = vmax.xlane.f32.xlu0 %v328
    %v330 = vpop.xlane.xlu0 %329
    %v331 = vsub.f32 %v322, %v327
    %v332 = vsub.f32 %v323, %v330
    %v333 = vmul.f32 %v331, 1.442695
    %v334 = vpow.pop %v333
    %v335 = vmul.f32 %v332, 1.442695
    %v336 = vpow.pop %v335
    %v337 = vsel %vm324, %v334, 0.0
    %338 = vadd.xlane.f32.xlu0 %v337
    %v339 = vpop.xlane.xlu0 %338
    %v340 = vsel %vm324, %v336, 0.0
    %341 = vadd.xlane.f32.xlu0 %v340
    %v342 = vpop.xlane.xlu0 %341
    %343 = vrot.lane.b32.xlu0 %v177, 64
    %v344 = vpop.permute.xlu0 %343
    %345 = vrot.lane.b32.xlu0 %v182, 64
    %v346 = vpop.permute.xlu0 %345
    %v350 = vsel %vm324, %v334, 0
    %v353 = vsel %vm324, %v336, 0
    %355 = vmatprep.subr.mxu0 0.0
    %356 = vmatpush1.msra.mxu0 %v344
    %357 = vmatprep.subr.mxu0 0.0
    %358 = vmatpush1.msra.mxu0 %v346
    %359 = vmatprep.subr.mxu0 0.0
    %360 = vmatpush1.msra.mxu0 0.0
    %361 = vmatprep.subr.mxu0 0.0
    %362 = vmatpush1.msra.mxu0 0.0
    %363 = vmatprep.subr.mxu0 0.0
    %364 = vmatpush1.msra.mxu0 0.0
    %365 = vmatprep.subr.mxu0 0.0
    %366 = vmatpush1.msra.mxu0 0.0
    %367 = vmatprep.subr.mxu0 0.0
    %368 = vmatpush1.msra.mxu0 0.0
    %369 = vmatprep.subr.mxu0 0.0
    %370 = vmatpush1.msra.mxu0 0.0
    %371 = vmatprep.subr.mxu0 0.0
    %372 = vmatpush1.msra.mxu0 0.0
    %373 = vmatprep.subr.mxu0 0.0
    %374 = vmatpush1.msra.mxu0 0.0
    %375 = vmatprep.subr.mxu0 0.0
    %376 = vmatpush1.msra.mxu0 0.0
    %377 = vmatprep.subr.mxu0 0.0
    %378 = vmatpush1.msra.mxu0 0.0
    %379 = vmatprep.subr.mxu0 0.0
    %380 = vmatpush1.msra.mxu0 0.0
    %381 = vmatprep.subr.mxu0 0.0
    %382 = vmatpush1.msra.mxu0 0.0
    %383 = vmatprep.subr.mxu0 0.0
    %384 = vmatpush1.msra.mxu0 0.0
    %385 = vmatprep.subr.mxu0 0.0
    %386 = vmatpush1.msra.mxu0 0.0
    %387 = vmatprep.subr.mxu0 0.0
    %388 = vmatpush1.msra.mxu0 0.0
    %389 = vmatprep.subr.mxu0 0.0
    %390 = vmatpush1.msra.mxu0 0.0
    %391 = vmatprep.subr.mxu0 0.0
    %392 = vmatpush1.msra.mxu0 0.0
    %393 = vmatprep.subr.mxu0 0.0
    %394 = vmatpush1.msra.mxu0 0.0
    %395 = vmatprep.subr.mxu0 0.0
    %396 = vmatpush1.msra.mxu0 0.0
    %397 = vmatprep.subr.mxu0 0.0
    %398 = vmatpush1.msra.mxu0 0.0
    %399 = vmatprep.subr.mxu0 0.0
    %400 = vmatpush1.msra.mxu0 0.0
    %401 = vmatprep.subr.mxu0 0.0
    %402 = vmatpush1.msra.mxu0 0.0
    %403 = vmatprep.subr.mxu0 0.0
    %404 = vmatpush1.msra.mxu0 0.0
    %405 = vmatprep.subr.mxu0 0.0
    %406 = vmatpush1.msra.mxu0 0.0
    %407 = vmatprep.subr.mxu0 0.0
    %408 = vmatpush1.msra.mxu0 0.0
    %409 = vmatprep.subr.mxu0 0.0
    %410 = vmatpush1.msra.mxu0 0.0
    %411 = vmatprep.subr.mxu0 0.0
    %412 = vmatpush1.msra.mxu0 0.0
    %413 = vmatprep.subr.mxu0 0.0
    %414 = vmatpush1.msra.mxu0 0.0
    %415 = vmatprep.subr.mxu0 0.0
    %416 = vmatpush1.msra.mxu0 0.0
    %417 = vmatprep.subr.mxu0 0.0
    %418 = vmatpush1.msra.mxu0 0.0
    %419 = vmatprep.mubr.f32.mxu0 0.0
    %420 = vmatmul.mubr.f32.gmra.mrb[0].mxu0 %v350
    %v421 = vpop.f32.mrb[0].mxu0
    %v422 = vadd.f32 0.0, %v421
    %v423 = vpop.f32.mrb[0].mxu0
    %424 = vmatprep.mubr.f32.mxu0 0.0
    %425 = vmatmul.mubr.f32.gmra.mrb[0].mxu0 %v353
    %v426 = vpop.f32.mrb[0].mxu0
    %v427 = vadd.f32 0.0, %v426
    %v428 = vpop.f32.mrb[0].mxu0
    %429 = vdwg.mxu0
    %v430 = vrcp.pop %v339
    %v431 = vmul.f32 %v422, %v430
    %v432 = vrcp.pop %v342
    %v433 = vmul.f32 %v427, %v432
    %434 = vrot.lane.b32.xlu0 %v228, 120
    %v435 = vpop.permute.xlu0 %434
    %436 = vrot.lane.b32.xlu0 %v229, 120
    %v437 = vpop.permute.xlu0 %436
    %438 = vrot.lane.b32.xlu0 %v177, 88
    %v439 = vpop.permute.xlu0 %438
    %440 = vrot.lane.b32.xlu0 %v182, 88
    %v441 = vpop.permute.xlu0 %440
    %v442 = vsel %vm236, %v435, 0
    %v444 = vsel %vm236, %v437, 0
    %v446 = vsel %vm236, %v439, 0
    %v448 = vsel %vm236, %v441, 0
    %450 = vmatprep.subr.mxu0 0.0
    %451 = vmatpush1.xpose.msra.mxu0 %v446
    %452 = vmatprep.subr.mxu0 0.0
    %453 = vmatpush1.xpose.msra.mxu0 %v448
    %454 = vmatprep.subr.mxu0 0.0
    %455 = vmatpush1.xpose.msra.mxu0 0.0
    %456 = vmatprep.subr.mxu0 0.0
    %457 = vmatpush1.xpose.msra.mxu0 0.0
    %458 = vmatprep.subr.mxu0 0.0
    %459 = vmatpush1.xpose.msra.mxu0 0.0
    %460 = vmatprep.subr.mxu0 0.0
    %461 = vmatpush1.xpose.msra.mxu0 0.0
    %462 = vmatprep.subr.mxu0 0.0
    %463 = vmatpush1.xpose.msra.mxu0 0.0
    %464 = vmatprep.subr.mxu0 0.0
    %465 = vmatpush1.xpose.msra.mxu0 0.0
    %466 = vmatprep.subr.mxu0 0.0
    %467 = vmatpush1.xpose.msra.mxu0 0.0
    %468 = vmatprep.subr.mxu0 0.0
    %469 = vmatpush1.xpose.msra.mxu0 0.0
    %470 = vmatprep.subr.mxu0 0.0
    %471 = vmatpush1.xpose.msra.mxu0 0.0
    %472 = vmatprep.subr.mxu0 0.0
    %473 = vmatpush1.xpose.msra.mxu0 0.0
    %474 = vmatprep.subr.mxu0 0.0
    %475 = vmatpush1.xpose.msra.mxu0 0.0
    %476 = vmatprep.subr.mxu0 0.0
    %477 = vmatpush1.xpose.msra.mxu0 0.0
    %478 = vmatprep.subr.mxu0 0.0
    %479 = vmatpush1.xpose.msra.mxu0 0.0
    %480 = vmatprep.subr.mxu0 0.0
    %481 = vmatpush1.xpose.msra.mxu0 0.0
    %482 = vmatprep.subr.mxu0 0.0
    %483 = vmatpush1.xpose.msra.mxu0 0.0
    %484 = vmatprep.subr.mxu0 0.0
    %485 = vmatpush1.xpose.msra.mxu0 0.0
    %486 = vmatprep.subr.mxu0 0.0
    %487 = vmatpush1.xpose.msra.mxu0 0.0
    %488 = vmatprep.subr.mxu0 0.0
    %489 = vmatpush1.xpose.msra.mxu0 0.0
    %490 = vmatprep.subr.mxu0 0.0
    %491 = vmatpush1.xpose.msra.mxu0 0.0
    %492 = vmatprep.subr.mxu0 0.0
    %493 = vmatpush1.xpose.msra.mxu0 0.0
    %494 = vmatprep.subr.mxu0 0.0
    %495 = vmatpush1.xpose.msra.mxu0 0.0
    %496 = vmatprep.subr.mxu0 0.0
    %497 = vmatpush1.xpose.msra.mxu0 0.0
    %498 = vmatprep.subr.mxu0 0.0
    %499 = vmatpush1.xpose.msra.mxu0 0.0
    %500 = vmatprep.subr.mxu0 0.0
    %501 = vmatpush1.xpose.msra.mxu0 0.0
    %502 = vmatprep.subr.mxu0 0.0
    %503 = vmatpush1.xpose.msra.mxu0 0.0
    %504 = vmatprep.subr.mxu0 0.0
    %505 = vmatpush1.xpose.msra.mxu0 0.0
    %506 = vmatprep.subr.mxu0 0.0
    %507 = vmatpush1.xpose.msra.mxu0 0.0
    %508 = vmatprep.subr.mxu0 0.0
    %509 = vmatpush1.xpose.msra.mxu0 0.0
    %510 = vmatprep.subr.mxu0 0.0
    %511 = vmatpush1.xpose.msra.mxu0 0.0
    %512 = vmatprep.subr.mxu0 0.0
    %513 = vmatpush1.xpose.msra.mxu0 0.0
    %514 = vmatprep.mubr.f32.mxu0 0.0
    %515 = vmatmul.mubr.f32.gmra.mrb[0].mxu0 %v442
    %v516 = vpop.f32.mrb[0].mxu0
    %v517 = vadd.f32 0.0, %v516
    %v518 = vpop.f32.mrb[0].mxu0
    %519 = vmatprep.mubr.f32.mxu0 0.0
    %520 = vmatmul.mubr.f32.gmra.mrb[0].mxu0 %v444
    %v521 = vpop.f32.mrb[0].mxu0
    %v522 = vadd.f32 0.0, %v521
    %v523 = vpop.f32.mrb[0].mxu0
    %524 = vdwg.mxu0
    %v525 = vsel %vm226, %v517, -1e+30
    %v526 = vsel %vm227, %v522, -1e+30
    %v527 = vsel %vm324, %v525, -inf
    %528 = vmax.xlane.f32.xlu0 %v527
    %v529 = vpop.xlane.xlu0 %528
    %v530 = vsel %vm324, %v526, -inf
    %531 = vmax.xlane.f32.xlu0 %v530
    %v532 = vpop.xlane.xlu0 %531
    %v533 = vsub.f32 %v525, %v529
    %v534 = vsub.f32 %v526, %v532
    %v535 = vmul.f32 %v533, 1.442695
    %v536 = vpow.pop %v535
    %v537 = vmul.f32 %v534, 1.442695
    %v538 = vpow.pop %v537
    %v539 = vsel %vm324, %v536, 0.0
    %540 = vadd.xlane.f32.xlu0 %v539
    %v541 = vpop.xlane.xlu0 %540
    %v542 = vsel %vm324, %v538, 0.0
    %543 = vadd.xlane.f32.xlu0 %v542
    %v544 = vpop.xlane.xlu0 %543
    %545 = vrot.lane.b32.xlu0 %v177, 56
    %v546 = vpop.permute.xlu0 %545
    %547 = vrot.lane.b32.xlu0 %v182, 56
    %v548 = vpop.permute.xlu0 %547
    %v552 = vsel %vm324, %v536, 0
    %v555 = vsel %vm324, %v538, 0
    %557 = vmatprep.subr.mxu0 0.0
    %558 = vmatpush1.msra.mxu0 %v546
    %559 = vmatprep.subr.mxu0 0.0
    %560 = vmatpush1.msra.mxu0 %v548
    %561 = vmatprep.subr.mxu0 0.0
    %562 = vmatpush1.msra.mxu0 0.0
    %563 = vmatprep.subr.mxu0 0.0
    %564 = vmatpush1.msra.mxu0 0.0
    %565 = vmatprep.subr.mxu0 0.0
    %566 = vmatpush1.msra.mxu0 0.0
    %567 = vmatprep.subr.mxu0 0.0
    %568 = vmatpush1.msra.mxu0 0.0
    %569 = vmatprep.subr.mxu0 0.0
    %570 = vmatpush1.msra.mxu0 0.0
    %571 = vmatprep.subr.mxu0 0.0
    %572 = vmatpush1.msra.mxu0 0.0
    %573 = vmatprep.subr.mxu0 0.0
    %574 = vmatpush1.msra.mxu0 0.0
    %575 = vmatprep.subr.mxu0 0.0
    %576 = vmatpush1.msra.mxu0 0.0
    %577 = vmatprep.subr.mxu0 0.0
    %578 = vmatpush1.msra.mxu0 0.0
    %579 = vmatprep.subr.mxu0 0.0
    %580 = vmatpush1.msra.mxu0 0.0
    %581 = vmatprep.subr.mxu0 0.0
    %582 = vmatpush1.msra.mxu0 0.0
    %583 = vmatprep.subr.mxu0 0.0
    %584 = vmatpush1.msra.mxu0 0.0
    %585 = vmatprep.subr.mxu0 0.0
    %586 = vmatpush1.msra.mxu0 0.0
    %587 = vmatprep.subr.mxu0 0.0
    %588 = vmatpush1.msra.mxu0 0.0
    %589 = vmatprep.subr.mxu0 0.0
    %590 = vmatpush1.msra.mxu0 0.0
    %591 = vmatprep.subr.mxu0 0.0
    %592 = vmatpush1.msra.mxu0 0.0
    %593 = vmatprep.subr.mxu0 0.0
    %594 = vmatpush1.msra.mxu0 0.0
    %595 = vmatprep.subr.mxu0 0.0
    %596 = vmatpush1.msra.mxu0 0.0
    %597 = vmatprep.subr.mxu0 0.0
    %598 = vmatpush1.msra.mxu0 0.0
    %599 = vmatprep.subr.mxu0 0.0
    %600 = vmatpush1.msra.mxu0 0.0
    %601 = vmatprep.subr.mxu0 0.0
    %602 = vmatpush1.msra.mxu0 0.0
    %603 = vmatprep.subr.mxu0 0.0
    %604 = vmatpush1.msra.mxu0 0.0
    %605 = vmatprep.subr.mxu0 0.0
    %606 = vmatpush1.msra.mxu0 0.0
    %607 = vmatprep.subr.mxu0 0.0
    %608 = vmatpush1.msra.mxu0 0.0
    %609 = vmatprep.subr.mxu0 0.0
    %610 = vmatpush1.msra.mxu0 0.0
    %611 = vmatprep.subr.mxu0 0.0
    %612 = vmatpush1.msra.mxu0 0.0
    %613 = vmatprep.subr.mxu0 0.0
    %614 = vmatpush1.msra.mxu0 0.0
    %615 = vmatprep.subr.mxu0 0.0
    %616 = vmatpush1.msra.mxu0 0.0
    %617 = vmatprep.subr.mxu0 0.0
    %618 = vmatpush1.msra.mxu0 0.0
    %619 = vmatprep.subr.mxu0 0.0
    %620 = vmatpush1.msra.mxu0 0.0
    %621 = vmatprep.mubr.f32.mxu0 0.0
    %622 = vmatmul.mubr.f32.gmra.mrb[0].mxu0 %v552
    %v623 = vpop.f32.mrb[0].mxu0
    %v624 = vadd.f32 0.0, %v623
    %v625 = vpop.f32.mrb[0].mxu0
    %626 = vmatprep.mubr.f32.mxu0 0.0
    %627 = vmatmul.mubr.f32.gmra.mrb[0].mxu0 %v555
    %v628 = vpop.f32.mrb[0].mxu0
    %v629 = vadd.f32 0.0, %v628
    %v630 = vpop.f32.mrb[0].mxu0
    %631 = vdwg.mxu0
    %v632 = vrcp.pop %v541
    %v633 = vmul.f32 %v624, %v632
    %v634 = vrcp.pop %v544
    %v635 = vmul.f32 %v629, %v634
    %636 = vrot.lane.b32.xlu0 %v228, 112
    %v637 = vpop.permute.xlu0 %636
    %638 = vrot.lane.b32.xlu0 %v229, 112
    %v639 = vpop.permute.xlu0 %638
    %640 = vrot.lane.b32.xlu0 %v177, 80
    %v641 = vpop.permute.xlu0 %640
    %642 = vrot.lane.b32.xlu0 %v182, 80
    %v643 = vpop.permute.xlu0 %642
    %v644 = vsel %vm236, %v637, 0
    %v646 = vsel %vm236, %v639, 0
    %v648 = vsel %vm236, %v641, 0
    %v650 = vsel %vm236, %v643, 0
    %652 = vmatprep.subr.mxu0 0.0
    %653 = vmatpush1.xpose.msra.mxu0 %v648
    %654 = vmatprep.subr.mxu0 0.0
    %655 = vmatpush1.xpose.msra.mxu0 %v650
    %656 = vmatprep.subr.mxu0 0.0
    %657 = vmatpush1.xpose.msra.mxu0 0.0
    %658 = vmatprep.subr.mxu0 0.0
    %659 = vmatpush1.xpose.msra.mxu0 0.0
    %660 = vmatprep.subr.mxu0 0.0
    %661 = vmatpush1.xpose.msra.mxu0 0.0
    %662 = vmatprep.subr.mxu0 0.0
    %663 = vmatpush1.xpose.msra.mxu0 0.0
    %664 = vmatprep.subr.mxu0 0.0
    %665 = vmatpush1.xpose.msra.mxu0 0.0
    %666 = vmatprep.subr.mxu0 0.0
    %667 = vmatpush1.xpose.msra.mxu0 0.0
    %668 = vmatprep.subr.mxu0 0.0
    %669 = vmatpush1.xpose.msra.mxu0 0.0
    %670 = vmatprep.subr.mxu0 0.0
    %671 = vmatpush1.xpose.msra.mxu0 0.0
    %672 = vmatprep.subr.mxu0 0.0
    %673 = vmatpush1.xpose.msra.mxu0 0.0
    %674 = vmatprep.subr.mxu0 0.0
    %675 = vmatpush1.xpose.msra.mxu0 0.0
    %676 = vmatprep.subr.mxu0 0.0
    %677 = vmatpush1.xpose.msra.mxu0 0.0
    %678 = vmatprep.subr.mxu0 0.0
    %679 = vmatpush1.xpose.msra.mxu0 0.0
    %680 = vmatprep.subr.mxu0 0.0
    %681 = vmatpush1.xpose.msra.mxu0 0.0
    %682 = vmatprep.subr.mxu0 0.0
    %683 = vmatpush1.xpose.msra.mxu0 0.0
    %684 = vmatprep.subr.mxu0 0.0
    %685 = vmatpush1.xpose.msra.mxu0 0.0
    %686 = vmatprep.subr.mxu0 0.0
    %687 = vmatpush1.xpose.msra.mxu0 0.0
    %688 = vmatprep.subr.mxu0 0.0
    %689 = vmatpush1.xpose.msra.mxu0 0.0
    %690 = vmatprep.subr.mxu0 0.0
    %691 = vmatpush1.xpose.msra.mxu0 0.0
    %692 = vmatprep.subr.mxu0 0.0
    %693 = vmatpush1.xpose.msra.mxu0 0.0
    %694 = vmatprep.subr.mxu0 0.0
    %695 = vmatpush1.xpose.msra.mxu0 0.0
    %696 = vmatprep.subr.mxu0 0.0
    %697 = vmatpush1.xpose.msra.mxu0 0.0
    %698 = vmatprep.subr.mxu0 0.0
    %699 = vmatpush1.xpose.msra.mxu0 0.0
    %700 = vmatprep.subr.mxu0 0.0
    %701 = vmatpush1.xpose.msra.mxu0 0.0
    %702 = vmatprep.subr.mxu0 0.0
    %703 = vmatpush1.xpose.msra.mxu0 0.0
    %704 = vmatprep.subr.mxu0 0.0
    %705 = vmatpush1.xpose.msra.mxu0 0.0
    %706 = vmatprep.subr.mxu0 0.0
    %707 = vmatpush1.xpose.msra.mxu0 0.0
    %708 = vmatprep.subr.mxu0 0.0
    %709 = vmatpush1.xpose.msra.mxu0 0.0
    %710 = vmatprep.subr.mxu0 0.0
    %711 = vmatpush1.xpose.msra.mxu0 0.0
    %712 = vmatprep.subr.mxu0 0.0
    %713 = vmatpush1.xpose.msra.mxu0 0.0
    %714 = vmatprep.subr.mxu0 0.0
    %715 = vmatpush1.xpose.msra.mxu0 0.0
    %716 = vmatprep.mubr.f32.mxu0 0.0
    %717 = vmatmul.mubr.f32.gmra.mrb[0].mxu0 %v644
    %v718 = vpop.f32.mrb[0].mxu0
    %v719 = vadd.f32 0.0, %v718
    %v720 = vpop.f32.mrb[0].mxu0
    %721 = vmatprep.mubr.f32.mxu0 0.0
    %722 = vmatmul.mubr.f32.gmra.mrb[0].mxu0 %v646
    %v723 = vpop.f32.mrb[0].mxu0
    %v724 = vadd.f32 0.0, %v723
    %v725 = vpop.f32.mrb[0].mxu0
    %726 = vdwg.mxu0
    %v727 = vsel %vm226, %v719, -1e+30
    %v728 = vsel %vm227, %v724, -1e+30
    %v729 = vsel %vm324, %v727, -inf
    %730 = vmax.xlane.f32.xlu0 %v729
    %v731 = vpop.xlane.xlu0 %730
    %v732 = vsel %vm324, %v728, -inf
    %733 = vmax.xlane.f32.xlu0 %v732
    %v734 = vpop.xlane.xlu0 %733
    %v735 = vsub.f32 %v727, %v731
    %v736 = vsub.f32 %v728, %v734
    %v737 = vmul.f32 %v735, 1.442695
    %v738 = vpow.pop %v737
    %v739 = vmul.f32 %v736, 1.442695
    %v740 = vpow.pop %v739
    %v741 = vsel %vm324, %v738, 0.0
    %742 = vadd.xlane.f32.xlu0 %v741
    %v743 = vpop.xlane.xlu0 %742
    %v744 = vsel %vm324, %v740, 0.0
    %745 = vadd.xlane.f32.xlu0 %v744
    %v746 = vpop.xlane.xlu0 %745
    %747 = vrot.lane.b32.xlu0 %v177, 48
    %v748 = vpop.permute.xlu0 %747
    %749 = vrot.lane.b32.xlu0 %v182, 48
    %v750 = vpop.permute.xlu0 %749
    %v754 = vsel %vm324, %v738, 0
    %v757 = vsel %vm324, %v740, 0
    %759 = vmatprep.subr.mxu0 0.0
    %760 = vmatpush1.msra.mxu0 %v748
    %761 = vmatprep.subr.mxu0 0.0
    %762 = vmatpush1.msra.mxu0 %v750
    %763 = vmatprep.subr.mxu0 0.0
    %764 = vmatpush1.msra.mxu0 0.0
    %765 = vmatprep.subr.mxu0 0.0
    %766 = vmatpush1.msra.mxu0 0.0
    %767 = vmatprep.subr.mxu0 0.0
    %768 = vmatpush1.msra.mxu0 0.0
    %769 = vmatprep.subr.mxu0 0.0
    %770 = vmatpush1.msra.mxu0 0.0
    %771 = vmatprep.subr.mxu0 0.0
    %772 = vmatpush1.msra.mxu0 0.0
    %773 = vmatprep.subr.mxu0 0.0
    %774 = vmatpush1.msra.mxu0 0.0
    %775 = vmatprep.subr.mxu0 0.0
    %776 = vmatpush1.msra.mxu0 0.0
    %777 = vmatprep.subr.mxu0 0.0
    %778 = vmatpush1.msra.mxu0 0.0
    %779 = vmatprep.subr.mxu0 0.0
    %780 = vmatpush1.msra.mxu0 0.0
    %781 = vmatprep.subr.mxu0 0.0
    %782 = vmatpush1.msra.mxu0 0.0
    %783 = vmatprep.subr.mxu0 0.0
    %784 = vmatpush1.msra.mxu0 0.0
    %785 = vmatprep.subr.mxu0 0.0
    %786 = vmatpush1.msra.mxu0 0.0
    %787 = vmatprep.subr.mxu0 0.0
    %788 = vmatpush1.msra.mxu0 0.0
    %789 = vmatprep.subr.mxu0 0.0
    %790 = vmatpush1.msra.mxu0 0.0
    %791 = vmatprep.subr.mxu0 0.0
    %792 = vmatpush1.msra.mxu0 0.0
    %793 = vmatprep.subr.mxu0 0.0
    %794 = vmatpush1.msra.mxu0 0.0
    %795 = vmatprep.subr.mxu0 0.0
    %796 = vmatpush1.msra.mxu0 0.0
    %797 = vmatprep.subr.mxu0 0.0
    %798 = vmatpush1.msra.mxu0 0.0
    %799 = vmatprep.subr.mxu0 0.0
    %800 = vmatpush1.msra.mxu0 0.0
    %801 = vmatprep.subr.mxu0 0.0
    %802 = vmatpush1.msra.mxu0 0.0
    %803 = vmatprep.subr.mxu0 0.0
    %804 = vmatpush1.msra.mxu0 0.0
    %805 = vmatprep.subr.mxu0 0.0
    %806 = vmatpush1.msra.mxu0 0.0
    %807 = vmatprep.subr.mxu0 0.0
    %808 = vmatpush1.msra.mxu0 0.0
    %809 = vmatprep.subr.mxu0 0.0
    %810 = vmatpush1.msra.mxu0 0.0
    %811 = vmatprep.subr.mxu0 0.0
    %812 = vmatpush1.msra.mxu0 0.0
    %813 = vmatprep.subr.mxu0 0.0
    %814 = vmatpush1.msra.mxu0 0.0
    %815 = vmatprep.subr.mxu0 0.0
    %816 = vmatpush1.msra.mxu0 0.0
    %817 = vmatprep.subr.mxu0 0.0
    %818 = vmatpush1.msra.mxu0 0.0
    %819 = vmatprep.subr.mxu0 0.0
    %820 = vmatpush1.msra.mxu0 0.0
    %821 = vmatprep.subr.mxu0 0.0
    %822 = vmatpush1.msra.mxu0 0.0
    %823 = vmatprep.mubr.f32.mxu0 0.0
    %824 = vmatmul.mubr.f32.gmra.mrb[0].mxu0 %v754
    %v825 = vpop.f32.mrb[0].mxu0
    %v826 = vadd.f32 0.0, %v825
    %v827 = vpop.f32.mrb[0].mxu0
    %828 = vmatprep.mubr.f32.mxu0 0.0
    %829 = vmatmul.mubr.f32.gmra.mrb[0].mxu0 %v757
    %v830 = vpop.f32.mrb[0].mxu0
    %v831 = vadd.f32 0.0, %v830
    %v832 = vpop.f32.mrb[0].mxu0
    %833 = vdwg.mxu0
    %v834 = vrcp.pop %v743
    %v835 = vmul.f32 %v826, %v834
    %v836 = vrcp.pop %v746
    %v837 = vmul.f32 %v831, %v836
    %838 = vrot.lane.b32.xlu0 %v228, 104
    %v839 = vpop.permute.xlu0 %838
    %840 = vrot.lane.b32.xlu0 %v229, 104
    %v841 = vpop.permute.xlu0 %840
    %842 = vrot.lane.b32.xlu0 %v177, 72
    %v843 = vpop.permute.xlu0 %842
    %844 = vrot.lane.b32.xlu0 %v182, 72
    %v845 = vpop.permute.xlu0 %844
    %v846 = vsel %vm236, %v839, 0
    %v848 = vsel %vm236, %v841, 0
    %v850 = vsel %vm236, %v843, 0
    %v852 = vsel %vm236, %v845, 0
    %854 = vmatprep.subr.mxu0 0.0
    %855 = vmatpush1.xpose.msra.mxu0 %v850
    %856 = vmatprep.subr.mxu0 0.0
    %857 = vmatpush1.xpose.msra.mxu0 %v852
    %858 = vmatprep.subr.mxu0 0.0
    %859 = vmatpush1.xpose.msra.mxu0 0.0
    %860 = vmatprep.subr.mxu0 0.0
    %861 = vmatpush1.xpose.msra.mxu0 0.0
    %862 = vmatprep.subr.mxu0 0.0
    %863 = vmatpush1.xpose.msra.mxu0 0.0
    %864 = vmatprep.subr.mxu0 0.0
    %865 = vmatpush1.xpose.msra.mxu0 0.0
    %866 = vmatprep.subr.mxu0 0.0
    %867 = vmatpush1.xpose.msra.mxu0 0.0
    %868 = vmatprep.subr.mxu0 0.0
    %869 = vmatpush1.xpose.msra.mxu0 0.0
    %870 = vmatprep.subr.mxu0 0.0
    %871 = vmatpush1.xpose.msra.mxu0 0.0
    %872 = vmatprep.subr.mxu0 0.0
    %873 = vmatpush1.xpose.msra.mxu0 0.0
    %874 = vmatprep.subr.mxu0 0.0
    %875 = vmatpush1.xpose.msra.mxu0 0.0
    %876 = vmatprep.subr.mxu0 0.0
    %877 = vmatpush1.xpose.msra.mxu0 0.0
    %878 = vmatprep.subr.mxu0 0.0
    %879 = vmatpush1.xpose.msra.mxu0 0.0
    %880 = vmatprep.subr.mxu0 0.0
    %881 = vmatpush1.xpose.msra.mxu0 0.0
    %882 = vmatprep.subr.mxu0 0.0
    %883 = vmatpush1.xpose.msra.mxu0 0.0
    %884 = vmatprep.subr.mxu0 0.0
    %885 = vmatpush1.xpose.msra.mxu0 0.0
    %886 = vmatprep.subr.mxu0 0.0
    %887 = vmatpush1.xpose.msra.mxu0 0.0
    %888 = vmatprep.subr.mxu0 0.0
    %889 = vmatpush1.xpose.msra.mxu0 0.0
    %890 = vmatprep.subr.mxu0 0.0
    %891 = vmatpush1.xpose.msra.mxu0 0.0
    %892 = vmatprep.subr.mxu0 0.0
    %893 = vmatpush1.xpose.msra.mxu0 0.0
    %894 = vmatprep.subr.mxu0 0.0
    %895 = vmatpush1.xpose.msra.mxu0 0.0
    %896 = vmatprep.subr.mxu0 0.0
    %897 = vmatpush1.xpose.msra.mxu0 0.0
    %898 = vmatprep.subr.mxu0 0.0
    %899 = vmatpush1.xpose.msra.mxu0 0.0
    %900 = vmatprep.subr.mxu0 0.0
    %901 = vmatpush1.xpose.msra.mxu0 0.0
    %902 = vmatprep.subr.mxu0 0.0
    %903 = vmatpush1.xpose.msra.mxu0 0.0
    %904 = vmatprep.subr.mxu0 0.0
    %905 = vmatpush1.xpose.msra.mxu0 0.0
    %906 = vmatprep.subr.mxu0 0.0
    %907 = vmatpush1.xpose.msra.mxu0 0.0
    %908 = vmatprep.subr.mxu0 0.0
    %909 = vmatpush1.xpose.msra.mxu0 0.0
    %910 = vmatprep.subr.mxu0 0.0
    %911 = vmatpush1.xpose.msra.mxu0 0.0
    %912 = vmatprep.subr.mxu0 0.0
    %913 = vmatpush1.xpose.msra.mxu0 0.0
    %914 = vmatprep.subr.mxu0 0.0
    %915 = vmatpush1.xpose.msra.mxu0 0.0
    %916 = vmatprep.subr.mxu0 0.0
    %917 = vmatpush1.xpose.msra.mxu0 0.0
    %918 = vmatprep.mubr.f32.mxu0 0.0
    %919 = vmatmul.mubr.f32.gmra.mrb[0].mxu0 %v846
    %v920 = vpop.f32.mrb[0].mxu0
    %v921 = vadd.f32 0.0, %v920
    %v922 = vpop.f32.mrb[0].mxu0
    %923 = vmatprep.mubr.f32.mxu0 0.0
    %924 = vmatmul.mubr.f32.gmra.mrb[0].mxu0 %v848
    %v925 = vpop.f32.mrb[0].mxu0
    %v926 = vadd.f32 0.0, %v925
    %v927 = vpop.f32.mrb[0].mxu0
    %928 = vdwg.mxu0
    %v929 = vsel %vm226, %v921, -1e+30
    %v930 = vsel %vm227, %v926, -1e+30
    %v931 = vsel %vm324, %v929, -inf
    %932 = vmax.xlane.f32.xlu0 %v931
    %v933 = vpop.xlane.xlu0 %932
    %v934 = vsel %vm324, %v930, -inf
    %935 = vmax.xlane.f32.xlu0 %v934
    %v936 = vpop.xlane.xlu0 %935
    %v937 = vsub.f32 %v929, %v933
    %v938 = vsub.f32 %v930, %v936
    %v939 = vmul.f32 %v937, 1.442695
    %v940 = vpow.pop %v939
    %v941 = vmul.f32 %v938, 1.442695
    %v942 = vpow.pop %v941
    %v943 = vsel %vm324, %v940, 0.0
    %944 = vadd.xlane.f32.xlu0 %v943
    %v945 = vpop.xlane.xlu0 %944
    %v946 = vsel %vm324, %v942, 0.0
    %947 = vadd.xlane.f32.xlu0 %v946
    %v948 = vpop.xlane.xlu0 %947
    %949 = vrot.lane.b32.xlu0 %v177, 40
    %v950 = vpop.permute.xlu0 %949
    %951 = vrot.lane.b32.xlu0 %v182, 40
    %v952 = vpop.permute.xlu0 %951
    %v956 = vsel %vm324, %v940, 0
    %v959 = vsel %vm324, %v942, 0
    %961 = vmatprep.subr.mxu0 0.0
    %962 = vmatpush1.msra.mxu0 %v950
    %963 = vmatprep.subr.mxu0 0.0
    %964 = vmatpush1.msra.mxu0 %v952
    %965 = vmatprep.subr.mxu0 0.0
    %966 = vmatpush1.msra.mxu0 0.0
    %967 = vmatprep.subr.mxu0 0.0
    %968 = vmatpush1.msra.mxu0 0.0
    %969 = vmatprep.subr.mxu0 0.0
    %970 = vmatpush1.msra.mxu0 0.0
    %971 = vmatprep.subr.mxu0 0.0
    %972 = vmatpush1.msra.mxu0 0.0
    %973 = vmatprep.subr.mxu0 0.0
    %974 = vmatpush1.msra.mxu0 0.0
    %975 = vmatprep.subr.mxu0 0.0
    %976 = vmatpush1.msra.mxu0 0.0
    %977 = vmatprep.subr.mxu0 0.0
    %978 = vmatpush1.msra.mxu0 0.0
    %979 = vmatprep.subr.mxu0 0.0
    %980 = vmatpush1.msra.mxu0 0.0
    %981 = vmatprep.subr.mxu0 0.0
    %982 = vmatpush1.msra.mxu0 0.0
    %983 = vmatprep.subr.mxu0 0.0
    %984 = vmatpush1.msra.mxu0 0.0
    %985 = vmatprep.subr.mxu0 0.0
    %986 = vmatpush1.msra.mxu0 0.0
    %987 = vmatprep.subr.mxu0 0.0
    %988 = vmatpush1.msra.mxu0 0.0
    %989 = vmatprep.subr.mxu0 0.0
    %990 = vmatpush1.msra.mxu0 0.0
    %991 = vmatprep.subr.mxu0 0.0
    %992 = vmatpush1.msra.mxu0 0.0
    %993 = vmatprep.subr.mxu0 0.0
    %994 = vmatpush1.msra.mxu0 0.0
    %995 = vmatprep.subr.mxu0 0.0
    %996 = vmatpush1.msra.mxu0 0.0
    %997 = vmatprep.subr.mxu0 0.0
    %998 = vmatpush1.msra.mxu0 0.0
    %999 = vmatprep.subr.mxu0 0.0
    %1000 = vmatpush1.msra.mxu0 0.0
    %1001 = vmatprep.subr.mxu0 0.0
    %1002 = vmatpush1.msra.mxu0 0.0
    %1003 = vmatprep.subr.mxu0 0.0
    %1004 = vmatpush1.msra.mxu0 0.0
    %1005 = vmatprep.subr.mxu0 0.0
    %1006 = vmatpush1.msra.mxu0 0.0
    %1007 = vmatprep.subr.mxu0 0.0
    %1008 = vmatpush1.msra.mxu0 0.0
    %1009 = vmatprep.subr.mxu0 0.0
    %1010 = vmatpush1.msra.mxu0 0.0
    %1011 = vmatprep.subr.mxu0 0.0
    %1012 = vmatpush1.msra.mxu0 0.0
    %1013 = vmatprep.subr.mxu0 0.0
    %1014 = vmatpush1.msra.mxu0 0.0
    %1015 = vmatprep.subr.mxu0 0.0
    %1016 = vmatpush1.msra.mxu0 0.0
    %1017 = vmatprep.subr.mxu0 0.0
    %1018 = vmatpush1.msra.mxu0 0.0
    %1019 = vmatprep.subr.mxu0 0.0
    %1020 = vmatpush1.msra.mxu0 0.0
    %1021 = vmatprep.subr.mxu0 0.0
    %1022 = vmatpush1.msra.mxu0 0.0
    %1023 = vmatprep.subr.mxu0 0.0
    %1024 = vmatpush1.msra.mxu0 0.0
    %1025 = vmatprep.mubr.f32.mxu0 0.0
    %1026 = vmatmul.mubr.f32.gmra.mrb[0].mxu0 %v956
    %v1027 = vpop.f32.mrb[0].mxu0
    %v1028 = vadd.f32 0.0, %v1027
    %v1029 = vpop.f32.mrb[0].mxu0
    %1030 = vmatprep.mubr.f32.mxu0 0.0
    %1031 = vmatmul.mubr.f32.gmra.mrb[0].mxu0 %v959
    %v1032 = vpop.f32.mrb[0].mxu0
    %v1033 = vadd.f32 0.0, %v1032
    %v1034 = vpop.f32.mrb[0].mxu0
    %1035 = vdwg.mxu0
    %v1036 = vrcp.pop %v945
    %v1037 = vmul.f32 %v1028, %v1036
    %v1038 = vrcp.pop %v948
    %v1039 = vmul.f32 %v1033, %v1038
    %1042 = vrot.lane.b32.xlu0 %v633, 8
    %v1043 = vpop.permute.xlu0 %1042
    %1044 = vrot.lane.b32.xlu0 %v635, 8
    %v1045 = vpop.permute.xlu0 %1044
    %1050 = vrot.lane.b32.xlu0 %v835, 16
    %v1051 = vpop.permute.xlu0 %1050
    %1052 = vrot.lane.b32.xlu0 %v837, 16
    %v1053 = vpop.permute.xlu0 %1052
    %1058 = vrot.lane.b32.xlu0 %v1037, 24
    %v1059 = vpop.permute.xlu0 %1058
    %1060 = vrot.lane.b32.xlu0 %v1039, 24
    %v1061 = vpop.permute.xlu0 %1060
    %v1064 = vsel %vm236, %v431, %v1043
    %v1065 = vsel %vm236, %v433, %v1045
    %v1066 = vsel %vm324, %v1064, %v1051
    %v1067 = vsel %vm324, %v1065, %v1053
    %vm1068 = vcmask 195584
    %v1069 = vsel %vm1068, %v1066, %v1059
    %v1070 = vsel %vm1068, %v1067, %v1061
    %v1071 = vld [vmem:[%s5] sm:$0xff]
    %v1072 = vld [vmem:[%s5 + $0x8] sm:$0xff]
    %v1073 = vld [vmem:[%s5 + $0x10] sm:$0xff]
    %v1074 = vld [vmem:[%s5 + $0x18] sm:$0xff]
    %v1075 = vld [vmem:[%s6] sm:$0x1]
    %v1077 = vlaneseq
    %v1078 = vshrl.u32 %v1077, 7
    %v1079 = vsub.s32 0, %v1078
    %v1080 = vrot.slane %v1075, %v1079
    %v1083 = vsel %vm49, %v1069, 0
    %v1086 = vsel %vm49, %v1070, 0
    %1088 = vmatprep.subr.mxu0 0.0
    %1089 = vmatpush1.msra.mxu0 %v1071
    %1090 = vmatprep.subr.mxu0 0.0
    %1091 = vmatpush1.msra.mxu0 %v1072
    %1092 = vmatprep.subr.mxu0 0.0
    %1093 = vmatpush1.msra.mxu0 %v1073
    %1094 = vmatprep.subr.mxu0 0.0
    %1095 = vmatpush1.msra.mxu0 %v1074
    %1096 = vmatprep.subr.mxu0 0.0
    %1097 = vmatpush1.msra.mxu0 0.0
    %1098 = vmatprep.subr.mxu0 0.0
    %1099 = vmatpush1.msra.mxu0 0.0
    %1100 = vmatprep.subr.mxu0 0.0
    %1101 = vmatpush1.msra.mxu0 0.0
    %1102 = vmatprep.subr.mxu0 0.0
    %1103 = vmatpush1.msra.mxu0 0.0
    %1104 = vmatprep.subr.mxu0 0.0
    %1105 = vmatpush1.msra.mxu0 0.0
    %1106 = vmatprep.subr.mxu0 0.0
    %1107 = vmatpush1.msra.mxu0 0.0
    %1108 = vmatprep.subr.mxu0 0.0
    %1109 = vmatpush1.msra.mxu0 0.0
    %1110 = vmatprep.subr.mxu0 0.0
    %1111 = vmatpush1.msra.mxu0 0.0
    %1112 = vmatprep.subr.mxu0 0.0
    %1113 = vmatpush1.msra.mxu0 0.0
    %1114 = vmatprep.subr.mxu0 0.0
    %1115 = vmatpush1.msra.mxu0 0.0
    %1116 = vmatprep.subr.mxu0 0.0
    %1117 = vmatpush1.msra.mxu0 0.0
    %1118 = vmatprep.subr.mxu0 0.0
    %1119 = vmatpush1.msra.mxu0 0.0
    %1120 = vmatprep.subr.mxu0 0.0
    %1121 = vmatpush1.msra.mxu0 0.0
    %1122 = vmatprep.subr.mxu0 0.0
    %1123 = vmatpush1.msra.mxu0 0.0
    %1124 = vmatprep.subr.mxu0 0.0
    %1125 = vmatpush1.msra.mxu0 0.0
    %1126 = vmatprep.subr.mxu0 0.0
    %1127 = vmatpush1.msra.mxu0 0.0
    %1128 = vmatprep.subr.mxu0 0.0
    %1129 = vmatpush1.msra.mxu0 0.0
    %1130 = vmatprep.subr.mxu0 0.0
    %1131 = vmatpush1.msra.mxu0 0.0
    %1132 = vmatprep.subr.mxu0 0.0
    %1133 = vmatpush1.msra.mxu0 0.0
    %1134 = vmatprep.subr.mxu0 0.0
    %1135 = vmatpush1.msra.mxu0 0.0
    %1136 = vmatprep.subr.mxu0 0.0
    %1137 = vmatpush1.msra.mxu0 0.0
    %1138 = vmatprep.subr.mxu0 0.0
    %1139 = vmatpush1.msra.mxu0 0.0
    %1140 = vmatprep.subr.mxu0 0.0
    %1141 = vmatpush1.msra.mxu0 0.0
    %1142 = vmatprep.subr.mxu0 0.0
    %1143 = vmatpush1.msra.mxu0 0.0
    %1144 = vmatprep.subr.mxu0 0.0
    %1145 = vmatpush1.msra.mxu0 0.0
    %1146 = vmatprep.subr.mxu0 0.0
    %1147 = vmatpush1.msra.mxu0 0.0
    %1148 = vmatprep.subr.mxu0 0.0
    %1149 = vmatpush1.msra.mxu0 0.0
    %1150 = vmatprep.subr.mxu0 0.0
    %1151 = vmatpush1.msra.mxu0 0.0
    %1152 = vmatprep.mubr.f32.mxu0 0.0
    %1153 = vmatmul.mubr.f32.gmra.mrb[0].mxu0 %v1083
    %v1154 = vpop.f32.mrb[0].mxu0
    %v1155 = vadd.f32 %v1080, %v1154
    %v1156 = vpop.f32.mrb[0].mxu0
    %1157 = vmatprep.mubr.f32.mxu0 0.0
    %1158 = vmatmul.mubr.f32.gmra.mrb[0].mxu0 %v1086
    %v1159 = vpop.f32.mrb[0].mxu0
    %v1160 = vadd.f32 %v1080, %v1159
    %v1161 = vpop.f32.mrb[0].mxu0
    %1162 = vdwg.mxu0
    %v1163 = vadd.f32 %v1155, %v45
    %v1164 = vadd.f32 %v1160, %v46
    %v1165 = vld [vmem:[%s7] sm:$0x1]
    %v1166 = vld [vmem:[%s8] sm:$0x1]
    %v1167 = vsel %vm49, %v1163, 0.0
    %1168 = vadd.xlane.f32.xlu0 %v1167
    %v1169 = vpop.xlane.xlu0 %1168
    %v1170 = vsel %vm49, %v1164, 0.0
    %1171 = vadd.xlane.f32.xlu0 %v1170
    %v1172 = vpop.xlane.xlu0 %1171
    %v1173 = vmul.f32 %v1169, %v56
    %v1174 = vmul.f32 %v1172, %v56
    %v1175 = vsub.f32 %v1163, %v1173
    %v1176 = vsub.f32 %v1164, %v1174
    %v1177 = vmul.f32 %v1175, %v1175
    %v1178 = vmul.f32 %v1176, %v1176
    %v1179 = vsel %vm49, %v1177, 0.0
    %1180 = vadd.xlane.f32.xlu0 %v1179
    %v1181 = vpop.xlane.xlu0 %1180
    %v1182 = vsel %vm49, %v1178, 0.0
    %1183 = vadd.xlane.f32.xlu0 %v1182
    %v1184 = vpop.xlane.xlu0 %1183
    %v1185 = vmul.f32 %v1181, %v56
    %v1186 = vmul.f32 %v1184, %v56
    %v1187 = vadd.f32 %v1185, 1e-06
    %v1188 = vadd.f32 %v1186, 1e-06
    %v1189 = vrsqrt.pop %v1187
    %v1190 = vrsqrt.pop %v1188
    %v1191 = vmul.f32 %v1175, %v1189
    %v1192 = vmul.f32 %v1176, %v1190
    %v1194 = vlaneseq
    %v1195 = vshrl.u32 %v1194, 7
    %v1196 = vsub.s32 0, %v1195
    %v1197 = vrot.slane %v1165, %v1196
    %v1199 = vmul.f32 %v1191, %v1197
    %v1200 = vmul.f32 %v1192, %v1197
    %v1202 = vlaneseq
    %v1203 = vshrl.u32 %v1202, 7
    %v1204 = vsub.s32 0, %v1203
    %v1205 = vrot.slane %v1166, %v1204
    %v1207 = vadd.f32 %v1199, %v1205
    %v1208 = vadd.f32 %v1200, %v1205
    %v1209 = vld [vmem:[%s9] sm:$0xff]
    %v1210 = vld [vmem:[%s9 + $0x8] sm:$0xff]
    %v1211 = vld [vmem:[%s9 + $0x10] sm:$0xff]
    %v1212 = vld [vmem:[%s9 + $0x18] sm:$0xff]
    %v1213 = vld [vmem:[%s10] sm:$0x1]
    %v1215 = vlaneseq
    %v1216 = vshrl.u32 %v1215, 7
    %v1217 = vsub.s32 0, %v1216
    %v1218 = vrot.slane %v1213, %v1217
    %v1221 = vsel %vm49, %v1207, 0
    %v1224 = vsel %vm49, %v1208, 0
    %1226 = vmatprep.subr.mxu0 0.0
    %1227 = vmatpush1.msra.mxu0 %v1209
    %1228 = vmatprep.subr.mxu0 0.0
    %1229 = vmatpush1.msra.mxu0 %v1210
    %1230 = vmatprep.subr.mxu0 0.0
    %1231 = vmatpush1.msra.mxu0 %v1211
    %1232 = vmatprep.subr.mxu0 0.0
    %1233 = vmatpush1.msra.mxu0 %v1212
    %1234 = vmatprep.subr.mxu0 0.0
    %1235 = vmatpush1.msra.mxu0 0.0
    %1236 = vmatprep.subr.mxu0 0.0
    %1237 = vmatpush1.msra.mxu0 0.0
    %1238 = vmatprep.subr.mxu0 0.0
    %1239 = vmatpush1.msra.mxu0 0.0
    %1240 = vmatprep.subr.mxu0 0.0
    %1241 = vmatpush1.msra.mxu0 0.0
    %1242 = vmatprep.subr.mxu0 0.0
    %1243 = vmatpush1.msra.mxu0 0.0
    %1244 = vmatprep.subr.mxu0 0.0
    %1245 = vmatpush1.msra.mxu0 0.0
    %1246 = vmatprep.subr.mxu0 0.0
    %1247 = vmatpush1.msra.mxu0 0.0
    %1248 = vmatprep.subr.mxu0 0.0
    %1249 = vmatpush1.msra.mxu0 0.0
    %1250 = vmatprep.subr.mxu0 0.0
    %1251 = vmatpush1.msra.mxu0 0.0
    %1252 = vmatprep.subr.mxu0 0.0
    %1253 = vmatpush1.msra.mxu0 0.0
    %1254 = vmatprep.subr.mxu0 0.0
    %1255 = vmatpush1.msra.mxu0 0.0
    %1256 = vmatprep.subr.mxu0 0.0
    %1257 = vmatpush1.msra.mxu0 0.0
    %1258 = vmatprep.subr.mxu0 0.0
    %1259 = vmatpush1.msra.mxu0 0.0
    %1260 = vmatprep.subr.mxu0 0.0
    %1261 = vmatpush1.msra.mxu0 0.0
    %1262 = vmatprep.subr.mxu0 0.0
    %1263 = vmatpush1.msra.mxu0 0.0
    %1264 = vmatprep.subr.mxu0 0.0
    %1265 = vmatpush1.msra.mxu0 0.0
    %1266 = vmatprep.subr.mxu0 0.0
    %1267 = vmatpush1.msra.mxu0 0.0
    %1268 = vmatprep.subr.mxu0 0.0
    %1269 = vmatpush1.msra.mxu0 0.0
    %1270 = vmatprep.subr.mxu0 0.0
    %1271 = vmatpush1.msra.mxu0 0.0
    %1272 = vmatprep.subr.mxu0 0.0
    %1273 = vmatpush1.msra.mxu0 0.0
    %1274 = vmatprep.subr.mxu0 0.0
    %1275 = vmatpush1.msra.mxu0 0.0
    %1276 = vmatprep.subr.mxu0 0.0
    %1277 = vmatpush1.msra.mxu0 0.0
    %1278 = vmatprep.subr.mxu0 0.0
    %1279 = vmatpush1.msra.mxu0 0.0
    %1280 = vmatprep.subr.mxu0 0.0
    %1281 = vmatpush1.msra.mxu0 0.0
    %1282 = vmatprep.subr.mxu0 0.0
    %1283 = vmatpush1.msra.mxu0 0.0
    %1284 = vmatprep.subr.mxu0 0.0
    %1285 = vmatpush1.msra.mxu0 0.0
    %1286 = vmatprep.subr.mxu0 0.0
    %1287 = vmatpush1.msra.mxu0 0.0
    %1288 = vmatprep.subr.mxu0 0.0
    %1289 = vmatpush1.msra.mxu0 0.0
    %1290 = vmatprep.mubr.f32.mxu0 0.0
    %1291 = vmatmul.mubr.f32.gmra.mrb[0].mxu0 %v1221
    %v1292 = vpop.f32.mrb[0].mxu0
    %v1293 = vadd.f32 %v1218, %v1292
    %v1294 = vpop.f32.mrb[0].mxu0
    %1295 = vmatprep.mubr.f32.mxu0 0.0
    %1296 = vmatmul.mubr.f32.gmra.mrb[0].mxu0 %v1224
    %v1297 = vpop.f32.mrb[0].mxu0
    %v1298 = vadd.f32 %v1218, %v1297
    %v1299 = vpop.f32.mrb[0].mxu0
    %1300 = vdwg.mxu0
    %v1301 = vmul.f32 %v1293, 0.5
    %v1302 = vmul.f32 %v1298, 0.5
    %v1303 = vmul.f32 %v1293, 0.70710677
    %v1304 = vmul.f32 %v1298, 0.70710677
    %v1305 = verf.f32.pop %v1303
    %v1306 = verf.f32.pop %v1304
    %v1307 = vadd.f32 %v1305, 1.0
    %v1308 = vadd.f32 %v1306, 1.0
    %v1309 = vmul.f32 %v1301, %v1307
    %v1310 = vmul.f32 %v1302, %v1308
    %v1311 = vld [vmem:[%s11] sm:$0xff]
    %v1312 = vld [vmem:[%s11 + $0x8] sm:$0xff]
    %v1313 = vld [vmem:[%s11 + $0x10] sm:$0xff]
    %v1314 = vld [vmem:[%s11 + $0x18] sm:$0xff]
    %v1315 = vld [vmem:[%s11 + $0x20] sm:$0xff]
    %v1316 = vld [vmem:[%s11 + $0x28] sm:$0xff]
    %v1317 = vld [vmem:[%s11 + $0x30] sm:$0xff]
    %v1318 = vld [vmem:[%s11 + $0x38] sm:$0xff]
    %v1319 = vld [vmem:[%s11 + $0x40] sm:$0xff]
    %v1320 = vld [vmem:[%s11 + $0x48] sm:$0xff]
    %v1321 = vld [vmem:[%s11 + $0x50] sm:$0xff]
    %v1322 = vld [vmem:[%s11 + $0x58] sm:$0xff]
    %v1323 = vld [vmem:[%s11 + $0x60] sm:$0xff]
    %v1324 = vld [vmem:[%s11 + $0x68] sm:$0xff]
    %v1325 = vld [vmem:[%s11 + $0x70] sm:$0xff]
    %v1326 = vld [vmem:[%s11 + $0x78] sm:$0xff]
    %v1327 = vld [vmem:[%s12] sm:$0x1]
    %v1329 = vlaneseq
    %v1330 = vshrl.u32 %v1329, 7
    %v1331 = vsub.s32 0, %v1330
    %v1332 = vrot.slane %v1327, %v1331
    %1334 = vmatprep.subr.mxu0 0.0
    %1335 = vmatpush1.msra.mxu0 %v1311
    %1336 = vmatprep.subr.mxu0 0.0
    %1337 = vmatpush1.msra.mxu0 %v1312
    %1338 = vmatprep.subr.mxu0 0.0
    %1339 = vmatpush1.msra.mxu0 %v1313
    %1340 = vmatprep.subr.mxu0 0.0
    %1341 = vmatpush1.msra.mxu0 %v1314
    %1342 = vmatprep.subr.mxu0 0.0
    %1343 = vmatpush1.msra.mxu0 %v1315
    %1344 = vmatprep.subr.mxu0 0.0
    %1345 = vmatpush1.msra.mxu0 %v1316
    %1346 = vmatprep.subr.mxu0 0.0
    %1347 = vmatpush1.msra.mxu0 %v1317
    %1348 = vmatprep.subr.mxu0 0.0
    %1349 = vmatpush1.msra.mxu0 %v1318
    %1350 = vmatprep.subr.mxu0 0.0
    %1351 = vmatpush1.msra.mxu0 %v1319
    %1352 = vmatprep.subr.mxu0 0.0
    %1353 = vmatpush1.msra.mxu0 %v1320
    %1354 = vmatprep.subr.mxu0 0.0
    %1355 = vmatpush1.msra.mxu0 %v1321
    %1356 = vmatprep.subr.mxu0 0.0
    %1357 = vmatpush1.msra.mxu0 %v1322
    %1358 = vmatprep.subr.mxu0 0.0
    %1359 = vmatpush1.msra.mxu0 %v1323
    %1360 = vmatprep.subr.mxu0 0.0
    %1361 = vmatpush1.msra.mxu0 %v1324
    %1362 = vmatprep.subr.mxu0 0.0
    %1363 = vmatpush1.msra.mxu0 %v1325
    %1364 = vmatprep.subr.mxu0 0.0
    %1365 = vmatpush1.msra.mxu0 %v1326
    %1366 = vmatprep.subr.mxu0 0.0
    %1367 = vmatpush1.msra.mxu0 0.0
    %1368 = vmatprep.subr.mxu0 0.0
    %1369 = vmatpush1.msra.mxu0 0.0
    %1370 = vmatprep.subr.mxu0 0.0
    %1371 = vmatpush1.msra.mxu0 0.0
    %1372 = vmatprep.subr.mxu0 0.0
    %1373 = vmatpush1.msra.mxu0 0.0
    %1374 = vmatprep.subr.mxu0 0.0
    %1375 = vmatpush1.msra.mxu0 0.0
    %1376 = vmatprep.subr.mxu0 0.0
    %1377 = vmatpush1.msra.mxu0 0.0
    %1378 = vmatprep.subr.mxu0 0.0
    %1379 = vmatpush1.msra.mxu0 0.0
    %1380 = vmatprep.subr.mxu0 0.0
    %1381 = vmatpush1.msra.mxu0 0.0
    %1382 = vmatprep.subr.mxu0 0.0
    %1383 = vmatpush1.msra.mxu0 0.0
    %1384 = vmatprep.subr.mxu0 0.0
    %1385 = vmatpush1.msra.mxu0 0.0
    %1386 = vmatprep.subr.mxu0 0.0
    %1387 = vmatpush1.msra.mxu0 0.0
    %1388 = vmatprep.subr.mxu0 0.0
    %1389 = vmatpush1.msra.mxu0 0.0
    %1390 = vmatprep.subr.mxu0 0.0
    %1391 = vmatpush1.msra.mxu0 0.0
    %1392 = vmatprep.subr.mxu0 0.0
    %1393 = vmatpush1.msra.mxu0 0.0
    %1394 = vmatprep.subr.mxu0 0.0
    %1395 = vmatpush1.msra.mxu0 0.0
    %1396 = vmatprep.subr.mxu0 0.0
    %1397 = vmatpush1.msra.mxu0 0.0
    %1398 = vmatprep.mubr.f32.mxu0 0.0
    %1399 = vmatmul.mubr.f32.gmra.mrb[0].mxu0 %v1309
    %v1400 = vpop.f32.mrb[0].mxu0
    %v1401 = vadd.f32 %v1332, %v1400
    %v1402 = vpop.f32.mrb[0].mxu0
    %1403 = vmatprep.mubr.f32.mxu0 0.0
    %1404 = vmatmul.mubr.f32.gmra.mrb[0].mxu0 %v1310
    %v1405 = vpop.f32.mrb[0].mxu0
    %v1406 = vadd.f32 %v1332, %v1405
    %v1407 = vpop.f32.mrb[0].mxu0
    %1408 = vdwg.mxu0
    %v1409 = vmul.f32 %v1401, 0.5
    %v1410 = vmul.f32 %v1406, 0.5
    %v1411 = vmul.f32 %v1401, 0.70710677
    %v1412 = vmul.f32 %v1406, 0.70710677
    %v1413 = verf.f32.pop %v1411
    %v1414 = verf.f32.pop %v1412
    %v1415 = vadd.f32 %v1413, 1.0
    %v1416 = vadd.f32 %v1414, 1.0
    %v1417 = vmul.f32 %v1409, %v1415
    %v1418 = vmul.f32 %v1410, %v1416
    %v1419 = vadd.f32 %v1163, %v1417
    %v1420 = vadd.f32 %v1164, %v1418
    %1421 = vst.msk [vmem:[#allocation2] sm:$0xff] %vm49, %v1419
    %1422 = vst.msk [vmem:[#allocation2 + $0x8] sm:$0xff] %vm49, %v1420
    // Predicated region
    $region54: #{transformer_block.1} parent=1 // pred_check
      _
    $region55: #{transformer_block.1} parent=1 // pred_check_branch
      %1424 = sbr.rel (0) target = $region57
    $region56: #{transformer_block.1} parent=1 // pred_region
      %s1426 = ssub.s32 256, 256
      %1427 = vsyncadd [#allocation3], %s1426
      %s1428 = sshll.u32 [#allocation2], 4
      %s1429 = int_to_ptr.vmem [resolvable:$true] %s1428
      %1434 = dma.vmem_to_hbm [thread:$0]  %s1429, 256, %s13, [#allocation3], 128, 128, 8
    $region57: #{transformer_block.1} parent=1 // pred_fallthru
      _
    // Predicated region
    $region58: #{transformer_block.1} parent=1 // pred_check
      _
    $region59: #{transformer_block.1} parent=1 // pred_check_branch
      %1436 = sbr.rel (0) target = $region61
    $region60: #{transformer_block.1} parent=1 // pred_region
      %1437 = dma.done [#allocation3], 256
    $region61: #{transformer_block.1} parent=1 // pred_fallthru
      _
    %1438 = vsyncpa [#allocation3], 1

</llo_original>
